<compile_context>
chip_gen: v5e
topology: v5e:2x2
jax: 0.10.0
libtpu: 0.0.40
codegen_flags: <defaults>
</compile_context>

<pallas_src>
import functools
import math

import jax
import jax.numpy as jnp
from jax.experimental import pallas as pl
from jax.experimental.pallas import tpu as pltpu


def _round_up(a, b):
    return ((a + b - 1) // b) * b


_TC_MAX = 32   # time-chunk cap: keeps the per-call VMEM footprint ~constant in T


def _choose_time_chunk(T):
    """Chunk length and whether ragged-tail masking is needed."""
    if T <= _TC_MAX:
        return T, False
    for tc in range(_TC_MAX, 7, -1):          # prefer a divisor of T
        if T % tc == 0:
            return tc, False
    return _TC_MAX, True                      # pad time with zeros + mask tail


def _choose_batch_tile(B):
    if B <= 8:
        return 8
    # >= 2 batch tiles so the "parallel" grid axis can feed both v7x
    # TensorCores; cap at 128 sublanes (could be raised to 256 on v6e).
    return min(128, _round_up((B + 1) // 2, 8))


def _vmem_limit_bytes(TC, TB, D, CH, CO, O):
    """Scoped-VMEM request derived from the actual buffer sum (+ headroom).

    Re-derived per call (feedback: do not reuse a v6e-validated budget on
    v7x's 64 MiB physical / 32 MiB scoped-default VMEM).
    """
    def lanes(n):
        return _round_up(n, 128)
    G = 3 * CH
    est = (
        2 * TC * TB * lanes(D) * 2                 # x blocks (bf16, double-buffered,
                                                   #  lane-padded D -> 128)
        + 3 * TC * TB * lanes(CH) * 4              # per-gate gi scratch (f32)
        + TB * lanes(CH) * 4                       # hidden-state scratch
        + 2 * 2 * (D * lanes(G)                    # Wi
                   + 3 * CH * lanes(CH)            # Wh_r / Wh_z / Wh_n
                   + CH * lanes(CO))               # Wdec        (bf16, 2 buffers)
        + 2 * TB * (lanes(O) + 128) * 4            # out + cam blocks
        + (2 << 20)                                # biases, compact, headroom
    )
    return int(min(max(est, 16 << 20), 32 << 20))


def _gru_router_kernel(x_ref, cam_ref, wi_ref, gb_ref, whr_ref, whz_ref,
                       whn_ref, bhn_ref, wd_ref, bd_ref, cmp_ref,
                       o_ref,
                       gir_ref, giz_ref, gin_ref, h_ref,
                       *, seq_len, mask_tail):
    """One (batch-tile, time-chunk) grid step.

    TB = batch tile, TC = time chunk, C = cameras, H = hidden, CH = C*H,
    G = 3*CH, D = input, O = output, CO = C*O.
      x_ref    (TC, TB, D)   bf16  time-major inputs for this chunk
      cam_ref  (TB, 1)       int32 camera index per sample
      wi_ref   (D, G)        bf16  input->gates (all cameras along lanes)
      gb_ref   (1, G)        f32   [bi_r+bh_r | bi_z+bh_z | bi_n]
      wh*_ref  (CH, CH)      bf16  per-gate hidden->gate, block-diag per camera
      bhn_ref  (1, CH)       f32   hidden-side bias of the n gate (not foldable)
      wd_ref   (CH, CO)      bf16  decoder, block-diag per camera
      bd_ref   (1, CO)       f32
      cmp_ref  (CO, O)       f32   sums the C O-wide lane blocks
      o_ref    (TB, O)       f32
      gi*_ref  (TC, TB, CH)  f32   per-gate input projections (scratch)
      h_ref    (TB, CH)      f32   hidden state, persists across time chunks
    """
    TC, TB, D = x_ref.shape
    CH = whr_ref.shape[0]
    CO = wd_ref.shape[1]
    O = o_ref.shape[1]
    t_chunk = pl.program_id(1)

    # Fresh hidden state at the start of each batch tile's time sweep.
    @pl.when(t_chunk == 0)
    def _():
        h_ref[...] = jnp.zeros_like(h_ref)

    # (1) Input projections for the whole chunk in ONE MXU matmul (bf16 in,
    #     f32 accumulate).  bi (and bh for the r/z gates) is folded into gb so
    #     the serialized loop pays no per-step bias add for those gates.
    xv = x_ref[...].reshape(TC * TB, D)
    gi = jnp.dot(xv, wi_ref[...], preferred_element_type=jnp.float32) + gb_ref[...]
    gir_ref[...] = gi[:, 0:CH].reshape(TC, TB, CH)
    giz_ref[...] = gi[:, CH:2 * CH].reshape(TC, TB, CH)
    gin_ref[...] = gi[:, 2 * CH:3 * CH].reshape(TC, TB, CH)

    bhn = bhn_ref[...]

    def sigmoid(v):
        # tanh goes to the EUP (its own VLIW slot); avoids the VALU divide of
        # 1/(1+exp(-v)).  Mathematically identical.
        return 0.5 * (jnp.tanh(0.5 * v) + 1.0)

    # (2) Serialized GRU recurrence.  All cameras' hidden trajectories evolve
    #     in parallel along the lane axis; gates are computed one at a time so
    #     live vregs stay inside the register file.  Only the (TB,CH)x(CH,CH)
    #     hidden-side matmuls remain sequential (bf16 operands, f32 acc).
    def step(t, h):
        h_b = h.astype(jnp.bfloat16)
        r = sigmoid(gir_ref[t] +
                    jnp.dot(h_b, whr_ref[...], preferred_element_type=jnp.float32))
        z = sigmoid(giz_ref[t] +
                    jnp.dot(h_b, whz_ref[...], preferred_element_type=jnp.float32))
        gh_n = jnp.dot(h_b, whn_ref[...], preferred_element_type=jnp.float32) + bhn
        n = jnp.tanh(gin_ref[t] + r * gh_n)
        h_new = n + z * (h - n)              # == (1-z)*n + z*h, one fewer mul/sub
        if mask_tail:                        # only traced when T % TC != 0
            h_new = jnp.where(t_chunk * TC + t < seq_len, h_new, h)
        return h_new

    # Chunk length is static -> fully unroll so the LLO scheduler can overlap
    # step t's EUP/VPU tail with step t+1's gi load and MXU push.
    h_fin = jax.lax.fori_loop(0, TC, step, h_ref[...], unroll=True)
    h_ref[...] = h_fin

    # (3) Last chunk: per-camera decoders (block-diag matmul), select each
    #     sample's camera block with a lane mask, compact to width O.
    @pl.when(t_chunk == pl.num_programs(1) - 1)
    def _():
        y_all = jnp.dot(h_fin.astype(jnp.bfloat16), wd_ref[...],
                        preferred_element_type=jnp.float32) + bd_ref[...]
        lane = jax.lax.broadcasted_iota(jnp.int32, (TB, CO), 1)
        lo = cam_ref[...] * O                                   # (TB, 1)
        sel = jnp.logical_and(lane >= lo, lane < lo + O)
        y_sel = jnp.where(sel, y_all, 0.0)
        y = jnp.dot(y_sel, cmp_ref[...], preferred_element_type=jnp.float32)
        o_ref[...] = y.astype(o_ref.dtype)


def _pack_params(w_ih, w_hh, b_ih, b_hh, w_dec, b_dec):
    """Pack per-camera GRUCell/Linear params into lane-dense / block-diag slabs.

    MXU operands (Wi, Wh_*, Wdec) are returned in bf16; biases stay f32.
    """
    C, threeH, D = w_ih.shape
    H = threeH // 3
    O = w_dec.shape[1]
    CH = C * H
    eye_c = jnp.eye(C, dtype=jnp.float32)

    def gate(w, g):
        return w[:, g * H:(g + 1) * H, :]

    def bias(b, g):
        return b[:, g * H:(g + 1) * H].reshape(CH)

    # Input->gate weights: (D, C*H) per gate (PyTorch gate order r, z, n),
    # concatenated along lanes -> (D, 3*C*H).
    wi = jnp.concatenate(
        [jnp.transpose(gate(w_ih, g), (2, 0, 1)).reshape(D, CH) for g in range(3)],
        axis=1)

    # Hidden->gate weights: per-gate block-diagonal (C*H, C*H).
    def block_diag_hh(g):
        whg = jnp.transpose(gate(w_hh, g), (0, 2, 1))            # (C, H_in, H_out)
        return jnp.einsum('cd,cij->cidj', eye_c, whg).reshape(CH, CH)

    whr, whz, whn = [block_diag_hh(g) for g in range(3)]

    # bh_r / bh_z can be folded into the precomputed input projection; bh_n
    # cannot (PyTorch: n = tanh(Wi_n x + bi_n + r * (Wh_n h + bh_n))).
    gbias = jnp.concatenate([bias(b_ih, 0) + bias(b_hh, 0),
                             bias(b_ih, 1) + bias(b_hh, 1),
                             bias(b_ih, 2)], axis=0)[None, :]
    bhn = bias(b_hh, 2)[None, :]

    # Decoder: block-diagonal (C*H, C*O) + compaction matrix summing the C
    # O-wide lane blocks down to the O output columns.
    wd_blocks = jnp.transpose(w_dec, (0, 2, 1))                  # (C, H, O)
    wd = jnp.einsum('cd,cho->chdo', eye_c, wd_blocks).reshape(CH, C * O)
    bd = b_dec.reshape(1, C * O)
    compact = jnp.tile(jnp.eye(O, dtype=jnp.float32), (C, 1))    # (C*O, O)

    bf16 = jnp.bfloat16
    f32 = jnp.float32
    return (wi.astype(bf16), gbias.astype(f32),
            whr.astype(bf16), whz.astype(bf16), whn.astype(bf16),
            bhn.astype(f32), wd.astype(bf16), bd.astype(f32), compact.astype(f32))


@functools.partial(jax.jit, static_argnames=("recurrence_type",))
def recurrent_network_forward(x, cam, w_ih, w_hh, b_ih, b_hh, w_dec, b_dec,
                              recurrence_type="gru"):
    """x: (B, T, D) f32, cam: (B,) int, w_ih: (C, 3H, D), w_hh: (C, 3H, H),
    b_ih/b_hh: (C, 3H), w_dec: (C, O, H), b_dec: (C, O).  Returns (B, O) f32."""
    if recurrence_type != "gru":
        # TODO(synk): recurrence_type='lstm' (LSTMCell) path is not implemented.
        raise NotImplementedError("only recurrence_type='gru' is implemented")

    B, T, D = x.shape
    C, threeH, _ = w_ih.shape
    H = threeH // 3
    O = w_dec.shape[1]
    CH = C * H
    CO = C * O
    G = 3 * CH
    # Compute-all-cameras routing only makes sense while C*H is ~1-2 vregs
    # wide.  TODO(synk): group samples by camera in the wrapper if C*H >> 256.

    wi, gbias, whr, whz, whn, bhn, wd, bd, compact = _pack_params(
        w_ih, w_hh, b_ih, b_hh, w_dec, b_dec)

    TB = _choose_batch_tile(B)
    Bp = _round_up(B, TB)
    TC, mask_tail = _choose_time_chunk(T)
    Tp = _round_up(T, TC)
    NC = Tp // TC

    xp = x
    camp = cam.astype(jnp.int32)
    if Bp != B:
        xp = jnp.pad(xp, ((0, Bp - B), (0, 0), (0, 0)))
        camp = jnp.pad(camp, (0, Bp - B))
    if Tp != T:  # zero-padded timesteps are masked off inside the kernel
        xp = jnp.pad(xp, ((0, 0), (0, Tp - T), (0, 0)))
    x_tm = jnp.transpose(xp, (1, 0, 2)).astype(jnp.bfloat16)     # (Tp, Bp, D)
    cam2d = camp.reshape(Bp, 1)

    kernel = functools.partial(_gru_router_kernel, seq_len=T, mask_tail=mask_tail)

    out = pl.pallas_call(
        kernel,
        out_shape=jax.ShapeDtypeStruct((Bp, O), jnp.float32),
        grid=(Bp // TB, NC),                       # batch tiles outer, time inner
        in_specs=[
            pl.BlockSpec((TC, TB, D), lambda i, t: (t, i, 0)),   # x  (time-major)
            pl.BlockSpec((TB, 1), lambda i, t: (i, 0)),          # cam
            pl.BlockSpec((D, G), lambda i, t: (0, 0)),           # Wi (VMEM-resident)
            pl.BlockSpec((1, G), lambda i, t: (0, 0)),           # folded gate bias
            pl.BlockSpec((CH, CH), lambda i, t: (0, 0)),         # Wh_r (block-diag)
            pl.BlockSpec((CH, CH), lambda i, t: (0, 0)),         # Wh_z
            pl.BlockSpec((CH, CH), lambda i, t: (0, 0)),         # Wh_n
            pl.BlockSpec((1, CH), lambda i, t: (0, 0)),          # bh_n
            pl.BlockSpec((CH, CO), lambda i, t: (0, 0)),         # Wdec (block-diag)
            pl.BlockSpec((1, CO), lambda i, t: (0, 0)),          # bdec
            pl.BlockSpec((CO, O), lambda i, t: (0, 0)),          # compaction matrix
        ],
        out_specs=pl.BlockSpec((TB, O), lambda i, t: (i, 0)),
        scratch_shapes=[
            pltpu.VMEM((TC, TB, CH), jnp.float32),   # gi_r (chunk-sized, not T)
            pltpu.VMEM((TC, TB, CH), jnp.float32),   # gi_z
            pltpu.VMEM((TC, TB, CH), jnp.float32),   # gi_n
            pltpu.VMEM((TB, CH), jnp.float32),       # hidden state (carried over t)
        ],
        compiler_params=pltpu.CompilerParams(
            dimension_semantics=("parallel", "arbitrary"),
            vmem_limit_bytes=_vmem_limit_bytes(TC, TB, D, CH, CO, O)),
    )(x_tm, cam2d, wi, gbias, whr, whz, whn, bhn, wd, bd, compact)
    return out[:B]


def reference(x, cam, w_ih, w_hh, b_ih, b_hh, w_dec, b_dec):
    """Pure-JAX f32 reference mirroring the PyTorch per-sample GRU routing loop."""
    B, T, D = x.shape
    H = w_hh.shape[-1]
    outs = []
    for b in range(B):
        c = int(cam[b])
        h = jnp.zeros((H,), jnp.float32)
        for t in range(T):
            gi = w_ih[c] @ x[b, t] + b_ih[c]
            gh = w_hh[c] @ h + b_hh[c]
            r = 1.0 / (1.0 + jnp.exp(-(gi[0:H] + gh[0:H])))
            z = 1.0 / (1.0 + jnp.exp(-(gi[H:2 * H] + gh[H:2 * H])))
            n = jnp.tanh(gi[2 * H:3 * H] + r * gh[2 * H:3 * H])
            h = (1.0 - z) * n + z * h
        outs.append(w_dec[c] @ h + b_dec[c])
    return jnp.stack(outs, 0)


if __name__ == "__main__":
    num_cameras = 4
    input_size = 32
    num_hidden_units = 32
    output_size = 8
    batch = 2
    seq_len = 8

    key = jax.random.PRNGKey(0)
    ks = jax.random.split(key, 8)

    x = jax.random.normal(ks[0], (batch, seq_len, input_size), dtype=jnp.float32)
    cam = jax.random.randint(ks[1], (batch,), 0, num_cameras, dtype=jnp.int32)

    lim = 1.0 / math.sqrt(num_hidden_units)
    w_ih = jax.random.uniform(ks[2], (num_cameras, 3 * num_hidden_units, input_size),
                              minval=-lim, maxval=lim, dtype=jnp.float32)
    w_hh = jax.random.uniform(ks[3], (num_cameras, 3 * num_hidden_units, num_hidden_units),
                              minval=-lim, maxval=lim, dtype=jnp.float32)
    b_ih = jax.random.uniform(ks[4], (num_cameras, 3 * num_hidden_units),
                              minval=-lim, maxval=lim, dtype=jnp.float32)
    b_hh = jax.random.uniform(ks[5], (num_cameras, 3 * num_hidden_units),
                              minval=-lim, maxval=lim, dtype=jnp.float32)
    w_dec = jax.random.uniform(ks[6], (num_cameras, output_size, num_hidden_units),
                               minval=-lim, maxval=lim, dtype=jnp.float32)
    b_dec = jax.random.uniform(ks[7], (num_cameras, output_size),
                               minval=-lim, maxval=lim, dtype=jnp.float32)

    out = recurrent_network_forward(x, cam, w_ih, w_hh, b_ih, b_hh, w_dec, b_dec)
    out = jax.block_until_ready(out)

    ref = reference(x, cam, w_ih, w_hh, b_ih, b_hh, w_dec, b_dec)
    assert out.shape == (batch, output_size), out.shape
    # MXU operands are bf16 (f32 accumulation), so validate against the f32
    # reference at a bf16-appropriate tolerance (per the review's guidance).
    assert jnp.allclose(out, ref, atol=2e-2, rtol=2e-2), (
        "mismatch vs reference: max abs err = "
        f"{float(jnp.max(jnp.abs(out - ref)))}")

    print("KERNEL_OK")
</pallas_src>

<mosaic_0001>
module attributes {stable_mosaic.version = 11 : i64} {
  func.func @_gru_router_kernel(%arg0: i32, %arg1: i32, %arg2: memref<8x8x32xbf16, #tpu.memory_space<vmem>>, %arg3: memref<8x1xi32, #tpu.memory_space<vmem>>, %arg4: memref<32x384xbf16, #tpu.memory_space<vmem>>, %arg5: memref<1x384xf32, #tpu.memory_space<vmem>>, %arg6: memref<128x128xbf16, #tpu.memory_space<vmem>>, %arg7: memref<128x128xbf16, #tpu.memory_space<vmem>>, %arg8: memref<128x128xbf16, #tpu.memory_space<vmem>>, %arg9: memref<1x128xf32, #tpu.memory_space<vmem>>, %arg10: memref<128x32xbf16, #tpu.memory_space<vmem>>, %arg11: memref<1x32xf32, #tpu.memory_space<vmem>>, %arg12: memref<32x8xf32, #tpu.memory_space<vmem>>, %arg13: memref<8x8xf32, #tpu.memory_space<vmem>>, %arg14: memref<8x8x128xf32, #tpu.memory_space<vmem>>, %arg15: memref<8x8x128xf32, #tpu.memory_space<vmem>>, %arg16: memref<8x8x128xf32, #tpu.memory_space<vmem>>, %arg17: memref<8x128xf32, #tpu.memory_space<vmem>>) attributes {dimension_semantics = [#tpu.dimension_semantics<parallel>, #tpu.dimension_semantics<arbitrary>], iteration_bounds = array<i64: 1, 1>, scalar_prefetch = 0 : i64, scratch_operands = 4 : i64, tpu.core_type = #tpu.core_type<tc>, window_params = [{transform_indices = @transform_0, window_bounds = array<i64: 8, 8, 32>}, {transform_indices = @transform_1, window_bounds = array<i64: 8, 1>}, {pipeline_mode = #tpu.pipeline_mode<synchronous>, transform_indices = @transform_2, window_bounds = array<i64: 32, 384>}, {pipeline_mode = #tpu.pipeline_mode<synchronous>, transform_indices = @transform_3, window_bounds = array<i64: 1, 384>}, {pipeline_mode = #tpu.pipeline_mode<synchronous>, transform_indices = @transform_4, window_bounds = array<i64: 128, 128>}, {pipeline_mode = #tpu.pipeline_mode<synchronous>, transform_indices = @transform_5, window_bounds = array<i64: 128, 128>}, {pipeline_mode = #tpu.pipeline_mode<synchronous>, transform_indices = @transform_6, window_bounds = array<i64: 128, 128>}, {pipeline_mode = #tpu.pipeline_mode<synchronous>, transform_indices = @transform_7, window_bounds = array<i64: 1, 128>}, {pipeline_mode = #tpu.pipeline_mode<synchronous>, transform_indices = @transform_8, window_bounds = array<i64: 128, 32>}, {pipeline_mode = #tpu.pipeline_mode<synchronous>, transform_indices = @transform_9, window_bounds = array<i64: 1, 32>}, {pipeline_mode = #tpu.pipeline_mode<synchronous>, transform_indices = @transform_10, window_bounds = array<i64: 32, 8>}, {transform_indices = @transform_11, window_bounds = array<i64: 8, 8>}]} {
    %c0_i32 = arith.constant 0 : i32
    %0 = arith.cmpi eq, %arg1, %c0_i32 : i32
    %1 = arith.extui %0 : i1 to i32
    %c0_i32_0 = arith.constant 0 : i32
    %2 = arith.cmpi ne, %1, %c0_i32_0 : i32
    scf.if %2 {
      %cst_193 = arith.constant 0.000000e+00 : f32
      %345 = vector.broadcast %cst_193 : f32 to vector<8x128xf32>
      %c0_194 = arith.constant 0 : index
      %c0_195 = arith.constant 0 : index
      %346 = vector.load %arg17[%c0_194, %c0_195] : memref<8x128xf32, #tpu.memory_space<vmem>>, vector<8x128xf32>
      tpu.vector_store %arg17[%c0_194, %c0_195], %345 {strides = array<i32>} : memref<8x128xf32, #tpu.memory_space<vmem>>, vector<8x128xf32>,
    } else {
    }
    %c0 = arith.constant 0 : index
    %c0_1 = arith.constant 0 : index
    %c0_2 = arith.constant 0 : index
    %3 = vector.load %arg2[%c0, %c0_1, %c0_2] : memref<8x8x32xbf16, #tpu.memory_space<vmem>>, vector<8x8x32xbf16>
    %4 = vector.shape_cast %3 : vector<8x8x32xbf16> to vector<64x32xbf16>
    %c0_3 = arith.constant 0 : index
    %c0_4 = arith.constant 0 : index
    %5 = vector.load %arg4[%c0_3, %c0_4] : memref<32x384xbf16, #tpu.memory_space<vmem>>, vector<32x384xbf16>
    %cst = arith.constant dense<0.000000e+00> : vector<64x384xf32>
    %6 = tpu.matmul %4, %5, %cst {dimension_numbers = #tpu.dot_dimension_numbers<[1], [0], [0], [1], [0, 0, 1, 1], [], []>} : vector<64x32xbf16>, vector<32x384xbf16>, vector<64x384xf32> -> vector<64x384xf32>
    %c0_5 = arith.constant 0 : index
    %c0_6 = arith.constant 0 : index
    %7 = vector.load %arg5[%c0_5, %c0_6] : memref<1x384xf32, #tpu.memory_space<vmem>>, vector<1x384xf32>
    %8 = vector.broadcast %7 : vector<1x384xf32> to vector<64x384xf32>
    %9 = arith.addf %6, %8 : vector<64x384xf32>
    %10 = vector.extract_strided_slice %9 {offsets = [0, 0], sizes = [64, 128], strides = [1, 1]} : vector<64x384xf32> to vector<64x128xf32>
    %11 = vector.shape_cast %10 : vector<64x128xf32> to vector<8x8x128xf32>
    %c0_7 = arith.constant 0 : index
    %c0_8 = arith.constant 0 : index
    %c0_9 = arith.constant 0 : index
    %12 = vector.load %arg14[%c0_7, %c0_8, %c0_9] : memref<8x8x128xf32, #tpu.memory_space<vmem>>, vector<8x8x128xf32>
    tpu.vector_store %arg14[%c0_7, %c0_8, %c0_9], %11 {strides = array<i32>} : memref<8x8x128xf32, #tpu.memory_space<vmem>>, vector<8x8x128xf32>,
    %13 = vector.extract_strided_slice %9 {offsets = [0, 128], sizes = [64, 128], strides = [1, 1]} : vector<64x384xf32> to vector<64x128xf32>
    %14 = vector.shape_cast %13 : vector<64x128xf32> to vector<8x8x128xf32>
    %c0_10 = arith.constant 0 : index
    %c0_11 = arith.constant 0 : index
    %c0_12 = arith.constant 0 : index
    %15 = vector.load %arg15[%c0_10, %c0_11, %c0_12] : memref<8x8x128xf32, #tpu.memory_space<vmem>>, vector<8x8x128xf32>
    tpu.vector_store %arg15[%c0_10, %c0_11, %c0_12], %14 {strides = array<i32>} : memref<8x8x128xf32, #tpu.memory_space<vmem>>, vector<8x8x128xf32>,
    %16 = vector.extract_strided_slice %9 {offsets = [0, 256], sizes = [64, 128], strides = [1, 1]} : vector<64x384xf32> to vector<64x128xf32>
    %17 = vector.shape_cast %16 : vector<64x128xf32> to vector<8x8x128xf32>
    %c0_13 = arith.constant 0 : index
    %c0_14 = arith.constant 0 : index
    %c0_15 = arith.constant 0 : index
    %18 = vector.load %arg16[%c0_13, %c0_14, %c0_15] : memref<8x8x128xf32, #tpu.memory_space<vmem>>, vector<8x8x128xf32>
    tpu.vector_store %arg16[%c0_13, %c0_14, %c0_15], %17 {strides = array<i32>} : memref<8x8x128xf32, #tpu.memory_space<vmem>>, vector<8x8x128xf32>,
    %c0_16 = arith.constant 0 : index
    %c0_17 = arith.constant 0 : index
    %19 = vector.load %arg9[%c0_16, %c0_17] : memref<1x128xf32, #tpu.memory_space<vmem>>, vector<1x128xf32>
    %c0_18 = arith.constant 0 : index
    %c0_19 = arith.constant 0 : index
    %20 = vector.load %arg17[%c0_18, %c0_19] : memref<8x128xf32, #tpu.memory_space<vmem>>, vector<8x128xf32>
    %c0_i32_20 = arith.constant 0 : i32
    %21 = arith.truncf %20 : vector<8x128xf32> to vector<8x128xbf16>
    %22 = arith.index_cast %c0_i32_20 : i32 to index
    %c0_21 = arith.constant 0 : index
    %c0_22 = arith.constant 0 : index
    %23 = vector.load %arg14[%22, %c0_21, %c0_22] : memref<8x8x128xf32, #tpu.memory_space<vmem>>, vector<1x8x128xf32>
    %24 = vector.shape_cast %23 : vector<1x8x128xf32> to vector<8x128xf32>
    %c0_23 = arith.constant 0 : index
    %c0_24 = arith.constant 0 : index
    %25 = vector.load %arg6[%c0_23, %c0_24] : memref<128x128xbf16, #tpu.memory_space<vmem>>, vector<128x128xbf16>
    %cst_25 = arith.constant dense<0.000000e+00> : vector<8x128xf32>
    %26 = tpu.matmul %21, %25, %cst_25 {dimension_numbers = #tpu.dot_dimension_numbers<[1], [0], [0], [1], [0, 0, 1, 1], [], []>} : vector<8x128xbf16>, vector<128x128xbf16>, vector<8x128xf32> -> vector<8x128xf32>
    %27 = arith.addf %24, %26 : vector<8x128xf32>
    %cst_26 = arith.constant 5.000000e-01 : f32
    %28 = vector.broadcast %cst_26 : f32 to vector<8x128xf32>
    %29 = arith.mulf %28, %27 : vector<8x128xf32>
    %30 = math.tanh %29 : vector<8x128xf32>
    %cst_27 = arith.constant 1.000000e+00 : f32
    %31 = vector.broadcast %cst_27 : f32 to vector<8x128xf32>
    %32 = arith.addf %30, %31 : vector<8x128xf32>
    %cst_28 = arith.constant 5.000000e-01 : f32
    %33 = vector.broadcast %cst_28 : f32 to vector<8x128xf32>
    %34 = arith.mulf %33, %32 : vector<8x128xf32>
    %35 = arith.index_cast %c0_i32_20 : i32 to index
    %c0_29 = arith.constant 0 : index
    %c0_30 = arith.constant 0 : index
    %36 = vector.load %arg15[%35, %c0_29, %c0_30] : memref<8x8x128xf32, #tpu.memory_space<vmem>>, vector<1x8x128xf32>
    %37 = vector.shape_cast %36 : vector<1x8x128xf32> to vector<8x128xf32>
    %c0_31 = arith.constant 0 : index
    %c0_32 = arith.constant 0 : index
    %38 = vector.load %arg7[%c0_31, %c0_32] : memref<128x128xbf16, #tpu.memory_space<vmem>>, vector<128x128xbf16>
    %cst_33 = arith.constant dense<0.000000e+00> : vector<8x128xf32>
    %39 = tpu.matmul %21, %38, %cst_33 {dimension_numbers = #tpu.dot_dimension_numbers<[1], [0], [0], [1], [0, 0, 1, 1], [], []>} : vector<8x128xbf16>, vector<128x128xbf16>, vector<8x128xf32> -> vector<8x128xf32>
    %40 = arith.addf %37, %39 : vector<8x128xf32>
    %cst_34 = arith.constant 5.000000e-01 : f32
    %41 = vector.broadcast %cst_34 : f32 to vector<8x128xf32>
    %42 = arith.mulf %41, %40 : vector<8x128xf32>
    %43 = math.tanh %42 : vector<8x128xf32>
    %cst_35 = arith.constant 1.000000e+00 : f32
    %44 = vector.broadcast %cst_35 : f32 to vector<8x128xf32>
    %45 = arith.addf %43, %44 : vector<8x128xf32>
    %cst_36 = arith.constant 5.000000e-01 : f32
    %46 = vector.broadcast %cst_36 : f32 to vector<8x128xf32>
    %47 = arith.mulf %46, %45 : vector<8x128xf32>
    %c0_37 = arith.constant 0 : index
    %c0_38 = arith.constant 0 : index
    %48 = vector.load %arg8[%c0_37, %c0_38] : memref<128x128xbf16, #tpu.memory_space<vmem>>, vector<128x128xbf16>
    %cst_39 = arith.constant dense<0.000000e+00> : vector<8x128xf32>
    %49 = tpu.matmul %21, %48, %cst_39 {dimension_numbers = #tpu.dot_dimension_numbers<[1], [0], [0], [1], [0, 0, 1, 1], [], []>} : vector<8x128xbf16>, vector<128x128xbf16>, vector<8x128xf32> -> vector<8x128xf32>
    %50 = vector.broadcast %19 : vector<1x128xf32> to vector<8x128xf32>
    %51 = arith.addf %49, %50 : vector<8x128xf32>
    %52 = arith.index_cast %c0_i32_20 : i32 to index
    %c0_40 = arith.constant 0 : index
    %c0_41 = arith.constant 0 : index
    %53 = vector.load %arg16[%52, %c0_40, %c0_41] : memref<8x8x128xf32, #tpu.memory_space<vmem>>, vector<1x8x128xf32>
    %54 = vector.shape_cast %53 : vector<1x8x128xf32> to vector<8x128xf32>
    %55 = arith.mulf %34, %51 : vector<8x128xf32>
    %56 = arith.addf %54, %55 : vector<8x128xf32>
    %57 = math.tanh %56 : vector<8x128xf32>
    %58 = arith.subf %20, %57 : vector<8x128xf32>
    %59 = arith.mulf %47, %58 : vector<8x128xf32>
    %60 = arith.addf %57, %59 : vector<8x128xf32>
    %c1_i32 = arith.constant 1 : i32
    %61 = arith.truncf %60 : vector<8x128xf32> to vector<8x128xbf16>
    %62 = arith.index_cast %c1_i32 : i32 to index
    %c0_42 = arith.constant 0 : index
    %c0_43 = arith.constant 0 : index
    %63 = vector.load %arg14[%62, %c0_42, %c0_43] : memref<8x8x128xf32, #tpu.memory_space<vmem>>, vector<1x8x128xf32>
    %64 = vector.shape_cast %63 : vector<1x8x128xf32> to vector<8x128xf32>
    %c0_44 = arith.constant 0 : index
    %c0_45 = arith.constant 0 : index
    %65 = vector.load %arg6[%c0_44, %c0_45] : memref<128x128xbf16, #tpu.memory_space<vmem>>, vector<128x128xbf16>
    %cst_46 = arith.constant dense<0.000000e+00> : vector<8x128xf32>
    %66 = tpu.matmul %61, %65, %cst_46 {dimension_numbers = #tpu.dot_dimension_numbers<[1], [0], [0], [1], [0, 0, 1, 1], [], []>} : vector<8x128xbf16>, vector<128x128xbf16>, vector<8x128xf32> -> vector<8x128xf32>
    %67 = arith.addf %64, %66 : vector<8x128xf32>
    %cst_47 = arith.constant 5.000000e-01 : f32
    %68 = vector.broadcast %cst_47 : f32 to vector<8x128xf32>
    %69 = arith.mulf %68, %67 : vector<8x128xf32>
    %70 = math.tanh %69 : vector<8x128xf32>
    %cst_48 = arith.constant 1.000000e+00 : f32
    %71 = vector.broadcast %cst_48 : f32 to vector<8x128xf32>
    %72 = arith.addf %70, %71 : vector<8x128xf32>
    %cst_49 = arith.constant 5.000000e-01 : f32
    %73 = vector.broadcast %cst_49 : f32 to vector<8x128xf32>
    %74 = arith.mulf %73, %72 : vector<8x128xf32>
    %75 = arith.index_cast %c1_i32 : i32 to index
    %c0_50 = arith.constant 0 : index
    %c0_51 = arith.constant 0 : index
    %76 = vector.load %arg15[%75, %c0_50, %c0_51] : memref<8x8x128xf32, #tpu.memory_space<vmem>>, vector<1x8x128xf32>
    %77 = vector.shape_cast %76 : vector<1x8x128xf32> to vector<8x128xf32>
    %c0_52 = arith.constant 0 : index
    %c0_53 = arith.constant 0 : index
    %78 = vector.load %arg7[%c0_52, %c0_53] : memref<128x128xbf16, #tpu.memory_space<vmem>>, vector<128x128xbf16>
    %cst_54 = arith.constant dense<0.000000e+00> : vector<8x128xf32>
    %79 = tpu.matmul %61, %78, %cst_54 {dimension_numbers = #tpu.dot_dimension_numbers<[1], [0], [0], [1], [0, 0, 1, 1], [], []>} : vector<8x128xbf16>, vector<128x128xbf16>, vector<8x128xf32> -> vector<8x128xf32>
    %80 = arith.addf %77, %79 : vector<8x128xf32>
    %cst_55 = arith.constant 5.000000e-01 : f32
    %81 = vector.broadcast %cst_55 : f32 to vector<8x128xf32>
    %82 = arith.mulf %81, %80 : vector<8x128xf32>
    %83 = math.tanh %82 : vector<8x128xf32>
    %cst_56 = arith.constant 1.000000e+00 : f32
    %84 = vector.broadcast %cst_56 : f32 to vector<8x128xf32>
    %85 = arith.addf %83, %84 : vector<8x128xf32>
    %cst_57 = arith.constant 5.000000e-01 : f32
    %86 = vector.broadcast %cst_57 : f32 to vector<8x128xf32>
    %87 = arith.mulf %86, %85 : vector<8x128xf32>
    %c0_58 = arith.constant 0 : index
    %c0_59 = arith.constant 0 : index
    %88 = vector.load %arg8[%c0_58, %c0_59] : memref<128x128xbf16, #tpu.memory_space<vmem>>, vector<128x128xbf16>
    %cst_60 = arith.constant dense<0.000000e+00> : vector<8x128xf32>
    %89 = tpu.matmul %61, %88, %cst_60 {dimension_numbers = #tpu.dot_dimension_numbers<[1], [0], [0], [1], [0, 0, 1, 1], [], []>} : vector<8x128xbf16>, vector<128x128xbf16>, vector<8x128xf32> -> vector<8x128xf32>
    %90 = vector.broadcast %19 : vector<1x128xf32> to vector<8x128xf32>
    %91 = arith.addf %89, %90 : vector<8x128xf32>
    %92 = arith.index_cast %c1_i32 : i32 to index
    %c0_61 = arith.constant 0 : index
    %c0_62 = arith.constant 0 : index
    %93 = vector.load %arg16[%92, %c0_61, %c0_62] : memref<8x8x128xf32, #tpu.memory_space<vmem>>, vector<1x8x128xf32>
    %94 = vector.shape_cast %93 : vector<1x8x128xf32> to vector<8x128xf32>
    %95 = arith.mulf %74, %91 : vector<8x128xf32>
    %96 = arith.addf %94, %95 : vector<8x128xf32>
    %97 = math.tanh %96 : vector<8x128xf32>
    %98 = arith.subf %60, %97 : vector<8x128xf32>
    %99 = arith.mulf %87, %98 : vector<8x128xf32>
    %100 = arith.addf %97, %99 : vector<8x128xf32>
    %c2_i32 = arith.constant 2 : i32
    %101 = arith.truncf %100 : vector<8x128xf32> to vector<8x128xbf16>
    %102 = arith.index_cast %c2_i32 : i32 to index
    %c0_63 = arith.constant 0 : index
    %c0_64 = arith.constant 0 : index
    %103 = vector.load %arg14[%102, %c0_63, %c0_64] : memref<8x8x128xf32, #tpu.memory_space<vmem>>, vector<1x8x128xf32>
    %104 = vector.shape_cast %103 : vector<1x8x128xf32> to vector<8x128xf32>
    %c0_65 = arith.constant 0 : index
    %c0_66 = arith.constant 0 : index
    %105 = vector.load %arg6[%c0_65, %c0_66] : memref<128x128xbf16, #tpu.memory_space<vmem>>, vector<128x128xbf16>
    %cst_67 = arith.constant dense<0.000000e+00> : vector<8x128xf32>
    %106 = tpu.matmul %101, %105, %cst_67 {dimension_numbers = #tpu.dot_dimension_numbers<[1], [0], [0], [1], [0, 0, 1, 1], [], []>} : vector<8x128xbf16>, vector<128x128xbf16>, vector<8x128xf32> -> vector<8x128xf32>
    %107 = arith.addf %104, %106 : vector<8x128xf32>
    %cst_68 = arith.constant 5.000000e-01 : f32
    %108 = vector.broadcast %cst_68 : f32 to vector<8x128xf32>
    %109 = arith.mulf %108, %107 : vector<8x128xf32>
    %110 = math.tanh %109 : vector<8x128xf32>
    %cst_69 = arith.constant 1.000000e+00 : f32
    %111 = vector.broadcast %cst_69 : f32 to vector<8x128xf32>
    %112 = arith.addf %110, %111 : vector<8x128xf32>
    %cst_70 = arith.constant 5.000000e-01 : f32
    %113 = vector.broadcast %cst_70 : f32 to vector<8x128xf32>
    %114 = arith.mulf %113, %112 : vector<8x128xf32>
    %115 = arith.index_cast %c2_i32 : i32 to index
    %c0_71 = arith.constant 0 : index
    %c0_72 = arith.constant 0 : index
    %116 = vector.load %arg15[%115, %c0_71, %c0_72] : memref<8x8x128xf32, #tpu.memory_space<vmem>>, vector<1x8x128xf32>
    %117 = vector.shape_cast %116 : vector<1x8x128xf32> to vector<8x128xf32>
    %c0_73 = arith.constant 0 : index
    %c0_74 = arith.constant 0 : index
    %118 = vector.load %arg7[%c0_73, %c0_74] : memref<128x128xbf16, #tpu.memory_space<vmem>>, vector<128x128xbf16>
    %cst_75 = arith.constant dense<0.000000e+00> : vector<8x128xf32>
    %119 = tpu.matmul %101, %118, %cst_75 {dimension_numbers = #tpu.dot_dimension_numbers<[1], [0], [0], [1], [0, 0, 1, 1], [], []>} : vector<8x128xbf16>, vector<128x128xbf16>, vector<8x128xf32> -> vector<8x128xf32>
    %120 = arith.addf %117, %119 : vector<8x128xf32>
    %cst_76 = arith.constant 5.000000e-01 : f32
    %121 = vector.broadcast %cst_76 : f32 to vector<8x128xf32>
    %122 = arith.mulf %121, %120 : vector<8x128xf32>
    %123 = math.tanh %122 : vector<8x128xf32>
    %cst_77 = arith.constant 1.000000e+00 : f32
    %124 = vector.broadcast %cst_77 : f32 to vector<8x128xf32>
    %125 = arith.addf %123, %124 : vector<8x128xf32>
    %cst_78 = arith.constant 5.000000e-01 : f32
    %126 = vector.broadcast %cst_78 : f32 to vector<8x128xf32>
    %127 = arith.mulf %126, %125 : vector<8x128xf32>
    %c0_79 = arith.constant 0 : index
    %c0_80 = arith.constant 0 : index
    %128 = vector.load %arg8[%c0_79, %c0_80] : memref<128x128xbf16, #tpu.memory_space<vmem>>, vector<128x128xbf16>
    %cst_81 = arith.constant dense<0.000000e+00> : vector<8x128xf32>
    %129 = tpu.matmul %101, %128, %cst_81 {dimension_numbers = #tpu.dot_dimension_numbers<[1], [0], [0], [1], [0, 0, 1, 1], [], []>} : vector<8x128xbf16>, vector<128x128xbf16>, vector<8x128xf32> -> vector<8x128xf32>
    %130 = vector.broadcast %19 : vector<1x128xf32> to vector<8x128xf32>
    %131 = arith.addf %129, %130 : vector<8x128xf32>
    %132 = arith.index_cast %c2_i32 : i32 to index
    %c0_82 = arith.constant 0 : index
    %c0_83 = arith.constant 0 : index
    %133 = vector.load %arg16[%132, %c0_82, %c0_83] : memref<8x8x128xf32, #tpu.memory_space<vmem>>, vector<1x8x128xf32>
    %134 = vector.shape_cast %133 : vector<1x8x128xf32> to vector<8x128xf32>
    %135 = arith.mulf %114, %131 : vector<8x128xf32>
    %136 = arith.addf %134, %135 : vector<8x128xf32>
    %137 = math.tanh %136 : vector<8x128xf32>
    %138 = arith.subf %100, %137 : vector<8x128xf32>
    %139 = arith.mulf %127, %138 : vector<8x128xf32>
    %140 = arith.addf %137, %139 : vector<8x128xf32>
    %c3_i32 = arith.constant 3 : i32
    %141 = arith.truncf %140 : vector<8x128xf32> to vector<8x128xbf16>
    %142 = arith.index_cast %c3_i32 : i32 to index
    %c0_84 = arith.constant 0 : index
    %c0_85 = arith.constant 0 : index
    %143 = vector.load %arg14[%142, %c0_84, %c0_85] : memref<8x8x128xf32, #tpu.memory_space<vmem>>, vector<1x8x128xf32>
    %144 = vector.shape_cast %143 : vector<1x8x128xf32> to vector<8x128xf32>
    %c0_86 = arith.constant 0 : index
    %c0_87 = arith.constant 0 : index
    %145 = vector.load %arg6[%c0_86, %c0_87] : memref<128x128xbf16, #tpu.memory_space<vmem>>, vector<128x128xbf16>
    %cst_88 = arith.constant dense<0.000000e+00> : vector<8x128xf32>
    %146 = tpu.matmul %141, %145, %cst_88 {dimension_numbers = #tpu.dot_dimension_numbers<[1], [0], [0], [1], [0, 0, 1, 1], [], []>} : vector<8x128xbf16>, vector<128x128xbf16>, vector<8x128xf32> -> vector<8x128xf32>
    %147 = arith.addf %144, %146 : vector<8x128xf32>
    %cst_89 = arith.constant 5.000000e-01 : f32
    %148 = vector.broadcast %cst_89 : f32 to vector<8x128xf32>
    %149 = arith.mulf %148, %147 : vector<8x128xf32>
    %150 = math.tanh %149 : vector<8x128xf32>
    %cst_90 = arith.constant 1.000000e+00 : f32
    %151 = vector.broadcast %cst_90 : f32 to vector<8x128xf32>
    %152 = arith.addf %150, %151 : vector<8x128xf32>
    %cst_91 = arith.constant 5.000000e-01 : f32
    %153 = vector.broadcast %cst_91 : f32 to vector<8x128xf32>
    %154 = arith.mulf %153, %152 : vector<8x128xf32>
    %155 = arith.index_cast %c3_i32 : i32 to index
    %c0_92 = arith.constant 0 : index
    %c0_93 = arith.constant 0 : index
    %156 = vector.load %arg15[%155, %c0_92, %c0_93] : memref<8x8x128xf32, #tpu.memory_space<vmem>>, vector<1x8x128xf32>
    %157 = vector.shape_cast %156 : vector<1x8x128xf32> to vector<8x128xf32>
    %c0_94 = arith.constant 0 : index
    %c0_95 = arith.constant 0 : index
    %158 = vector.load %arg7[%c0_94, %c0_95] : memref<128x128xbf16, #tpu.memory_space<vmem>>, vector<128x128xbf16>
    %cst_96 = arith.constant dense<0.000000e+00> : vector<8x128xf32>
    %159 = tpu.matmul %141, %158, %cst_96 {dimension_numbers = #tpu.dot_dimension_numbers<[1], [0], [0], [1], [0, 0, 1, 1], [], []>} : vector<8x128xbf16>, vector<128x128xbf16>, vector<8x128xf32> -> vector<8x128xf32>
    %160 = arith.addf %157, %159 : vector<8x128xf32>
    %cst_97 = arith.constant 5.000000e-01 : f32
    %161 = vector.broadcast %cst_97 : f32 to vector<8x128xf32>
    %162 = arith.mulf %161, %160 : vector<8x128xf32>
    %163 = math.tanh %162 : vector<8x128xf32>
    %cst_98 = arith.constant 1.000000e+00 : f32
    %164 = vector.broadcast %cst_98 : f32 to vector<8x128xf32>
    %165 = arith.addf %163, %164 : vector<8x128xf32>
    %cst_99 = arith.constant 5.000000e-01 : f32
    %166 = vector.broadcast %cst_99 : f32 to vector<8x128xf32>
    %167 = arith.mulf %166, %165 : vector<8x128xf32>
    %c0_100 = arith.constant 0 : index
    %c0_101 = arith.constant 0 : index
    %168 = vector.load %arg8[%c0_100, %c0_101] : memref<128x128xbf16, #tpu.memory_space<vmem>>, vector<128x128xbf16>
    %cst_102 = arith.constant dense<0.000000e+00> : vector<8x128xf32>
    %169 = tpu.matmul %141, %168, %cst_102 {dimension_numbers = #tpu.dot_dimension_numbers<[1], [0], [0], [1], [0, 0, 1, 1], [], []>} : vector<8x128xbf16>, vector<128x128xbf16>, vector<8x128xf32> -> vector<8x128xf32>
    %170 = vector.broadcast %19 : vector<1x128xf32> to vector<8x128xf32>
    %171 = arith.addf %169, %170 : vector<8x128xf32>
    %172 = arith.index_cast %c3_i32 : i32 to index
    %c0_103 = arith.constant 0 : index
    %c0_104 = arith.constant 0 : index
    %173 = vector.load %arg16[%172, %c0_103, %c0_104] : memref<8x8x128xf32, #tpu.memory_space<vmem>>, vector<1x8x128xf32>
    %174 = vector.shape_cast %173 : vector<1x8x128xf32> to vector<8x128xf32>
    %175 = arith.mulf %154, %171 : vector<8x128xf32>
    %176 = arith.addf %174, %175 : vector<8x128xf32>
    %177 = math.tanh %176 : vector<8x128xf32>
    %178 = arith.subf %140, %177 : vector<8x128xf32>
    %179 = arith.mulf %167, %178 : vector<8x128xf32>
    %180 = arith.addf %177, %179 : vector<8x128xf32>
    %c4_i32 = arith.constant 4 : i32
    %181 = arith.truncf %180 : vector<8x128xf32> to vector<8x128xbf16>
    %182 = arith.index_cast %c4_i32 : i32 to index
    %c0_105 = arith.constant 0 : index
    %c0_106 = arith.constant 0 : index
    %183 = vector.load %arg14[%182, %c0_105, %c0_106] : memref<8x8x128xf32, #tpu.memory_space<vmem>>, vector<1x8x128xf32>
    %184 = vector.shape_cast %183 : vector<1x8x128xf32> to vector<8x128xf32>
    %c0_107 = arith.constant 0 : index
    %c0_108 = arith.constant 0 : index
    %185 = vector.load %arg6[%c0_107, %c0_108] : memref<128x128xbf16, #tpu.memory_space<vmem>>, vector<128x128xbf16>
    %cst_109 = arith.constant dense<0.000000e+00> : vector<8x128xf32>
    %186 = tpu.matmul %181, %185, %cst_109 {dimension_numbers = #tpu.dot_dimension_numbers<[1], [0], [0], [1], [0, 0, 1, 1], [], []>} : vector<8x128xbf16>, vector<128x128xbf16>, vector<8x128xf32> -> vector<8x128xf32>
    %187 = arith.addf %184, %186 : vector<8x128xf32>
    %cst_110 = arith.constant 5.000000e-01 : f32
    %188 = vector.broadcast %cst_110 : f32 to vector<8x128xf32>
    %189 = arith.mulf %188, %187 : vector<8x128xf32>
    %190 = math.tanh %189 : vector<8x128xf32>
    %cst_111 = arith.constant 1.000000e+00 : f32
    %191 = vector.broadcast %cst_111 : f32 to vector<8x128xf32>
    %192 = arith.addf %190, %191 : vector<8x128xf32>
    %cst_112 = arith.constant 5.000000e-01 : f32
    %193 = vector.broadcast %cst_112 : f32 to vector<8x128xf32>
    %194 = arith.mulf %193, %192 : vector<8x128xf32>
    %195 = arith.index_cast %c4_i32 : i32 to index
    %c0_113 = arith.constant 0 : index
    %c0_114 = arith.constant 0 : index
    %196 = vector.load %arg15[%195, %c0_113, %c0_114] : memref<8x8x128xf32, #tpu.memory_space<vmem>>, vector<1x8x128xf32>
    %197 = vector.shape_cast %196 : vector<1x8x128xf32> to vector<8x128xf32>
    %c0_115 = arith.constant 0 : index
    %c0_116 = arith.constant 0 : index
    %198 = vector.load %arg7[%c0_115, %c0_116] : memref<128x128xbf16, #tpu.memory_space<vmem>>, vector<128x128xbf16>
    %cst_117 = arith.constant dense<0.000000e+00> : vector<8x128xf32>
    %199 = tpu.matmul %181, %198, %cst_117 {dimension_numbers = #tpu.dot_dimension_numbers<[1], [0], [0], [1], [0, 0, 1, 1], [], []>} : vector<8x128xbf16>, vector<128x128xbf16>, vector<8x128xf32> -> vector<8x128xf32>
    %200 = arith.addf %197, %199 : vector<8x128xf32>
    %cst_118 = arith.constant 5.000000e-01 : f32
    %201 = vector.broadcast %cst_118 : f32 to vector<8x128xf32>
    %202 = arith.mulf %201, %200 : vector<8x128xf32>
    %203 = math.tanh %202 : vector<8x128xf32>
    %cst_119 = arith.constant 1.000000e+00 : f32
    %204 = vector.broadcast %cst_119 : f32 to vector<8x128xf32>
    %205 = arith.addf %203, %204 : vector<8x128xf32>
    %cst_120 = arith.constant 5.000000e-01 : f32
    %206 = vector.broadcast %cst_120 : f32 to vector<8x128xf32>
    %207 = arith.mulf %206, %205 : vector<8x128xf32>
    %c0_121 = arith.constant 0 : index
    %c0_122 = arith.constant 0 : index
    %208 = vector.load %arg8[%c0_121, %c0_122] : memref<128x128xbf16, #tpu.memory_space<vmem>>, vector<128x128xbf16>
    %cst_123 = arith.constant dense<0.000000e+00> : vector<8x128xf32>
    %209 = tpu.matmul %181, %208, %cst_123 {dimension_numbers = #tpu.dot_dimension_numbers<[1], [0], [0], [1], [0, 0, 1, 1], [], []>} : vector<8x128xbf16>, vector<128x128xbf16>, vector<8x128xf32> -> vector<8x128xf32>
    %210 = vector.broadcast %19 : vector<1x128xf32> to vector<8x128xf32>
    %211 = arith.addf %209, %210 : vector<8x128xf32>
    %212 = arith.index_cast %c4_i32 : i32 to index
    %c0_124 = arith.constant 0 : index
    %c0_125 = arith.constant 0 : index
    %213 = vector.load %arg16[%212, %c0_124, %c0_125] : memref<8x8x128xf32, #tpu.memory_space<vmem>>, vector<1x8x128xf32>
    %214 = vector.shape_cast %213 : vector<1x8x128xf32> to vector<8x128xf32>
    %215 = arith.mulf %194, %211 : vector<8x128xf32>
    %216 = arith.addf %214, %215 : vector<8x128xf32>
    %217 = math.tanh %216 : vector<8x128xf32>
    %218 = arith.subf %180, %217 : vector<8x128xf32>
    %219 = arith.mulf %207, %218 : vector<8x128xf32>
    %220 = arith.addf %217, %219 : vector<8x128xf32>
    %c5_i32 = arith.constant 5 : i32
    %221 = arith.truncf %220 : vector<8x128xf32> to vector<8x128xbf16>
    %222 = arith.index_cast %c5_i32 : i32 to index
    %c0_126 = arith.constant 0 : index
    %c0_127 = arith.constant 0 : index
    %223 = vector.load %arg14[%222, %c0_126, %c0_127] : memref<8x8x128xf32, #tpu.memory_space<vmem>>, vector<1x8x128xf32>
    %224 = vector.shape_cast %223 : vector<1x8x128xf32> to vector<8x128xf32>
    %c0_128 = arith.constant 0 : index
    %c0_129 = arith.constant 0 : index
    %225 = vector.load %arg6[%c0_128, %c0_129] : memref<128x128xbf16, #tpu.memory_space<vmem>>, vector<128x128xbf16>
    %cst_130 = arith.constant dense<0.000000e+00> : vector<8x128xf32>
    %226 = tpu.matmul %221, %225, %cst_130 {dimension_numbers = #tpu.dot_dimension_numbers<[1], [0], [0], [1], [0, 0, 1, 1], [], []>} : vector<8x128xbf16>, vector<128x128xbf16>, vector<8x128xf32> -> vector<8x128xf32>
    %227 = arith.addf %224, %226 : vector<8x128xf32>
    %cst_131 = arith.constant 5.000000e-01 : f32
    %228 = vector.broadcast %cst_131 : f32 to vector<8x128xf32>
    %229 = arith.mulf %228, %227 : vector<8x128xf32>
    %230 = math.tanh %229 : vector<8x128xf32>
    %cst_132 = arith.constant 1.000000e+00 : f32
    %231 = vector.broadcast %cst_132 : f32 to vector<8x128xf32>
    %232 = arith.addf %230, %231 : vector<8x128xf32>
    %cst_133 = arith.constant 5.000000e-01 : f32
    %233 = vector.broadcast %cst_133 : f32 to vector<8x128xf32>
    %234 = arith.mulf %233, %232 : vector<8x128xf32>
    %235 = arith.index_cast %c5_i32 : i32 to index
    %c0_134 = arith.constant 0 : index
    %c0_135 = arith.constant 0 : index
    %236 = vector.load %arg15[%235, %c0_134, %c0_135] : memref<8x8x128xf32, #tpu.memory_space<vmem>>, vector<1x8x128xf32>
    %237 = vector.shape_cast %236 : vector<1x8x128xf32> to vector<8x128xf32>
    %c0_136 = arith.constant 0 : index
    %c0_137 = arith.constant 0 : index
    %238 = vector.load %arg7[%c0_136, %c0_137] : memref<128x128xbf16, #tpu.memory_space<vmem>>, vector<128x128xbf16>
    %cst_138 = arith.constant dense<0.000000e+00> : vector<8x128xf32>
    %239 = tpu.matmul %221, %238, %cst_138 {dimension_numbers = #tpu.dot_dimension_numbers<[1], [0], [0], [1], [0, 0, 1, 1], [], []>} : vector<8x128xbf16>, vector<128x128xbf16>, vector<8x128xf32> -> vector<8x128xf32>
    %240 = arith.addf %237, %239 : vector<8x128xf32>
    %cst_139 = arith.constant 5.000000e-01 : f32
    %241 = vector.broadcast %cst_139 : f32 to vector<8x128xf32>
    %242 = arith.mulf %241, %240 : vector<8x128xf32>
    %243 = math.tanh %242 : vector<8x128xf32>
    %cst_140 = arith.constant 1.000000e+00 : f32
    %244 = vector.broadcast %cst_140 : f32 to vector<8x128xf32>
    %245 = arith.addf %243, %244 : vector<8x128xf32>
    %cst_141 = arith.constant 5.000000e-01 : f32
    %246 = vector.broadcast %cst_141 : f32 to vector<8x128xf32>
    %247 = arith.mulf %246, %245 : vector<8x128xf32>
    %c0_142 = arith.constant 0 : index
    %c0_143 = arith.constant 0 : index
    %248 = vector.load %arg8[%c0_142, %c0_143] : memref<128x128xbf16, #tpu.memory_space<vmem>>, vector<128x128xbf16>
    %cst_144 = arith.constant dense<0.000000e+00> : vector<8x128xf32>
    %249 = tpu.matmul %221, %248, %cst_144 {dimension_numbers = #tpu.dot_dimension_numbers<[1], [0], [0], [1], [0, 0, 1, 1], [], []>} : vector<8x128xbf16>, vector<128x128xbf16>, vector<8x128xf32> -> vector<8x128xf32>
    %250 = vector.broadcast %19 : vector<1x128xf32> to vector<8x128xf32>
    %251 = arith.addf %249, %250 : vector<8x128xf32>
    %252 = arith.index_cast %c5_i32 : i32 to index
    %c0_145 = arith.constant 0 : index
    %c0_146 = arith.constant 0 : index
    %253 = vector.load %arg16[%252, %c0_145, %c0_146] : memref<8x8x128xf32, #tpu.memory_space<vmem>>, vector<1x8x128xf32>
    %254 = vector.shape_cast %253 : vector<1x8x128xf32> to vector<8x128xf32>
    %255 = arith.mulf %234, %251 : vector<8x128xf32>
    %256 = arith.addf %254, %255 : vector<8x128xf32>
    %257 = math.tanh %256 : vector<8x128xf32>
    %258 = arith.subf %220, %257 : vector<8x128xf32>
    %259 = arith.mulf %247, %258 : vector<8x128xf32>
    %260 = arith.addf %257, %259 : vector<8x128xf32>
    %c6_i32 = arith.constant 6 : i32
    %261 = arith.truncf %260 : vector<8x128xf32> to vector<8x128xbf16>
    %262 = arith.index_cast %c6_i32 : i32 to index
    %c0_147 = arith.constant 0 : index
    %c0_148 = arith.constant 0 : index
    %263 = vector.load %arg14[%262, %c0_147, %c0_148] : memref<8x8x128xf32, #tpu.memory_space<vmem>>, vector<1x8x128xf32>
    %264 = vector.shape_cast %263 : vector<1x8x128xf32> to vector<8x128xf32>
    %c0_149 = arith.constant 0 : index
    %c0_150 = arith.constant 0 : index
    %265 = vector.load %arg6[%c0_149, %c0_150] : memref<128x128xbf16, #tpu.memory_space<vmem>>, vector<128x128xbf16>
    %cst_151 = arith.constant dense<0.000000e+00> : vector<8x128xf32>
    %266 = tpu.matmul %261, %265, %cst_151 {dimension_numbers = #tpu.dot_dimension_numbers<[1], [0], [0], [1], [0, 0, 1, 1], [], []>} : vector<8x128xbf16>, vector<128x128xbf16>, vector<8x128xf32> -> vector<8x128xf32>
    %267 = arith.addf %264, %266 : vector<8x128xf32>
    %cst_152 = arith.constant 5.000000e-01 : f32
    %268 = vector.broadcast %cst_152 : f32 to vector<8x128xf32>
    %269 = arith.mulf %268, %267 : vector<8x128xf32>
    %270 = math.tanh %269 : vector<8x128xf32>
    %cst_153 = arith.constant 1.000000e+00 : f32
    %271 = vector.broadcast %cst_153 : f32 to vector<8x128xf32>
    %272 = arith.addf %270, %271 : vector<8x128xf32>
    %cst_154 = arith.constant 5.000000e-01 : f32
    %273 = vector.broadcast %cst_154 : f32 to vector<8x128xf32>
    %274 = arith.mulf %273, %272 : vector<8x128xf32>
    %275 = arith.index_cast %c6_i32 : i32 to index
    %c0_155 = arith.constant 0 : index
    %c0_156 = arith.constant 0 : index
    %276 = vector.load %arg15[%275, %c0_155, %c0_156] : memref<8x8x128xf32, #tpu.memory_space<vmem>>, vector<1x8x128xf32>
    %277 = vector.shape_cast %276 : vector<1x8x128xf32> to vector<8x128xf32>
    %c0_157 = arith.constant 0 : index
    %c0_158 = arith.constant 0 : index
    %278 = vector.load %arg7[%c0_157, %c0_158] : memref<128x128xbf16, #tpu.memory_space<vmem>>, vector<128x128xbf16>
    %cst_159 = arith.constant dense<0.000000e+00> : vector<8x128xf32>
    %279 = tpu.matmul %261, %278, %cst_159 {dimension_numbers = #tpu.dot_dimension_numbers<[1], [0], [0], [1], [0, 0, 1, 1], [], []>} : vector<8x128xbf16>, vector<128x128xbf16>, vector<8x128xf32> -> vector<8x128xf32>
    %280 = arith.addf %277, %279 : vector<8x128xf32>
    %cst_160 = arith.constant 5.000000e-01 : f32
    %281 = vector.broadcast %cst_160 : f32 to vector<8x128xf32>
    %282 = arith.mulf %281, %280 : vector<8x128xf32>
    %283 = math.tanh %282 : vector<8x128xf32>
    %cst_161 = arith.constant 1.000000e+00 : f32
    %284 = vector.broadcast %cst_161 : f32 to vector<8x128xf32>
    %285 = arith.addf %283, %284 : vector<8x128xf32>
    %cst_162 = arith.constant 5.000000e-01 : f32
    %286 = vector.broadcast %cst_162 : f32 to vector<8x128xf32>
    %287 = arith.mulf %286, %285 : vector<8x128xf32>
    %c0_163 = arith.constant 0 : index
    %c0_164 = arith.constant 0 : index
    %288 = vector.load %arg8[%c0_163, %c0_164] : memref<128x128xbf16, #tpu.memory_space<vmem>>, vector<128x128xbf16>
    %cst_165 = arith.constant dense<0.000000e+00> : vector<8x128xf32>
    %289 = tpu.matmul %261, %288, %cst_165 {dimension_numbers = #tpu.dot_dimension_numbers<[1], [0], [0], [1], [0, 0, 1, 1], [], []>} : vector<8x128xbf16>, vector<128x128xbf16>, vector<8x128xf32> -> vector<8x128xf32>
    %290 = vector.broadcast %19 : vector<1x128xf32> to vector<8x128xf32>
    %291 = arith.addf %289, %290 : vector<8x128xf32>
    %292 = arith.index_cast %c6_i32 : i32 to index
    %c0_166 = arith.constant 0 : index
    %c0_167 = arith.constant 0 : index
    %293 = vector.load %arg16[%292, %c0_166, %c0_167] : memref<8x8x128xf32, #tpu.memory_space<vmem>>, vector<1x8x128xf32>
    %294 = vector.shape_cast %293 : vector<1x8x128xf32> to vector<8x128xf32>
    %295 = arith.mulf %274, %291 : vector<8x128xf32>
    %296 = arith.addf %294, %295 : vector<8x128xf32>
    %297 = math.tanh %296 : vector<8x128xf32>
    %298 = arith.subf %260, %297 : vector<8x128xf32>
    %299 = arith.mulf %287, %298 : vector<8x128xf32>
    %300 = arith.addf %297, %299 : vector<8x128xf32>
    %c7_i32 = arith.constant 7 : i32
    %301 = arith.truncf %300 : vector<8x128xf32> to vector<8x128xbf16>
    %302 = arith.index_cast %c7_i32 : i32 to index
    %c0_168 = arith.constant 0 : index
    %c0_169 = arith.constant 0 : index
    %303 = vector.load %arg14[%302, %c0_168, %c0_169] : memref<8x8x128xf32, #tpu.memory_space<vmem>>, vector<1x8x128xf32>
    %304 = vector.shape_cast %303 : vector<1x8x128xf32> to vector<8x128xf32>
    %c0_170 = arith.constant 0 : index
    %c0_171 = arith.constant 0 : index
    %305 = vector.load %arg6[%c0_170, %c0_171] : memref<128x128xbf16, #tpu.memory_space<vmem>>, vector<128x128xbf16>
    %cst_172 = arith.constant dense<0.000000e+00> : vector<8x128xf32>
    %306 = tpu.matmul %301, %305, %cst_172 {dimension_numbers = #tpu.dot_dimension_numbers<[1], [0], [0], [1], [0, 0, 1, 1], [], []>} : vector<8x128xbf16>, vector<128x128xbf16>, vector<8x128xf32> -> vector<8x128xf32>
    %307 = arith.addf %304, %306 : vector<8x128xf32>
    %cst_173 = arith.constant 5.000000e-01 : f32
    %308 = vector.broadcast %cst_173 : f32 to vector<8x128xf32>
    %309 = arith.mulf %308, %307 : vector<8x128xf32>
    %310 = math.tanh %309 : vector<8x128xf32>
    %cst_174 = arith.constant 1.000000e+00 : f32
    %311 = vector.broadcast %cst_174 : f32 to vector<8x128xf32>
    %312 = arith.addf %310, %311 : vector<8x128xf32>
    %cst_175 = arith.constant 5.000000e-01 : f32
    %313 = vector.broadcast %cst_175 : f32 to vector<8x128xf32>
    %314 = arith.mulf %313, %312 : vector<8x128xf32>
    %315 = arith.index_cast %c7_i32 : i32 to index
    %c0_176 = arith.constant 0 : index
    %c0_177 = arith.constant 0 : index
    %316 = vector.load %arg15[%315, %c0_176, %c0_177] : memref<8x8x128xf32, #tpu.memory_space<vmem>>, vector<1x8x128xf32>
    %317 = vector.shape_cast %316 : vector<1x8x128xf32> to vector<8x128xf32>
    %c0_178 = arith.constant 0 : index
    %c0_179 = arith.constant 0 : index
    %318 = vector.load %arg7[%c0_178, %c0_179] : memref<128x128xbf16, #tpu.memory_space<vmem>>, vector<128x128xbf16>
    %cst_180 = arith.constant dense<0.000000e+00> : vector<8x128xf32>
    %319 = tpu.matmul %301, %318, %cst_180 {dimension_numbers = #tpu.dot_dimension_numbers<[1], [0], [0], [1], [0, 0, 1, 1], [], []>} : vector<8x128xbf16>, vector<128x128xbf16>, vector<8x128xf32> -> vector<8x128xf32>
    %320 = arith.addf %317, %319 : vector<8x128xf32>
    %cst_181 = arith.constant 5.000000e-01 : f32
    %321 = vector.broadcast %cst_181 : f32 to vector<8x128xf32>
    %322 = arith.mulf %321, %320 : vector<8x128xf32>
    %323 = math.tanh %322 : vector<8x128xf32>
    %cst_182 = arith.constant 1.000000e+00 : f32
    %324 = vector.broadcast %cst_182 : f32 to vector<8x128xf32>
    %325 = arith.addf %323, %324 : vector<8x128xf32>
    %cst_183 = arith.constant 5.000000e-01 : f32
    %326 = vector.broadcast %cst_183 : f32 to vector<8x128xf32>
    %327 = arith.mulf %326, %325 : vector<8x128xf32>
    %c0_184 = arith.constant 0 : index
    %c0_185 = arith.constant 0 : index
    %328 = vector.load %arg8[%c0_184, %c0_185] : memref<128x128xbf16, #tpu.memory_space<vmem>>, vector<128x128xbf16>
    %cst_186 = arith.constant dense<0.000000e+00> : vector<8x128xf32>
    %329 = tpu.matmul %301, %328, %cst_186 {dimension_numbers = #tpu.dot_dimension_numbers<[1], [0], [0], [1], [0, 0, 1, 1], [], []>} : vector<8x128xbf16>, vector<128x128xbf16>, vector<8x128xf32> -> vector<8x128xf32>
    %330 = vector.broadcast %19 : vector<1x128xf32> to vector<8x128xf32>
    %331 = arith.addf %329, %330 : vector<8x128xf32>
    %332 = arith.index_cast %c7_i32 : i32 to index
    %c0_187 = arith.constant 0 : index
    %c0_188 = arith.constant 0 : index
    %333 = vector.load %arg16[%332, %c0_187, %c0_188] : memref<8x8x128xf32, #tpu.memory_space<vmem>>, vector<1x8x128xf32>
    %334 = vector.shape_cast %333 : vector<1x8x128xf32> to vector<8x128xf32>
    %335 = arith.mulf %314, %331 : vector<8x128xf32>
    %336 = arith.addf %334, %335 : vector<8x128xf32>
    %337 = math.tanh %336 : vector<8x128xf32>
    %338 = arith.subf %300, %337 : vector<8x128xf32>
    %339 = arith.mulf %327, %338 : vector<8x128xf32>
    %340 = arith.addf %337, %339 : vector<8x128xf32>
    %c8_i32 = arith.constant 8 : i32
    %c0_189 = arith.constant 0 : index
    %c0_190 = arith.constant 0 : index
    %341 = vector.load %arg17[%c0_189, %c0_190] : memref<8x128xf32, #tpu.memory_space<vmem>>, vector<8x128xf32>
    tpu.vector_store %arg17[%c0_189, %c0_190], %340 {strides = array<i32>} : memref<8x128xf32, #tpu.memory_space<vmem>>, vector<8x128xf32>,
    %c0_i32_191 = arith.constant 0 : i32
    %342 = arith.cmpi eq, %arg1, %c0_i32_191 : i32
    %343 = arith.extui %342 : i1 to i32
    %c0_i32_192 = arith.constant 0 : i32
    %344 = arith.cmpi ne, %343, %c0_i32_192 : i32
    scf.if %344 {
      %345 = arith.truncf %340 : vector<8x128xf32> to vector<8x128xbf16>
      %c0_193 = arith.constant 0 : index
      %c0_194 = arith.constant 0 : index
      %346 = vector.load %arg10[%c0_193, %c0_194] : memref<128x32xbf16, #tpu.memory_space<vmem>>, vector<128x32xbf16>
      %cst_195 = arith.constant dense<0.000000e+00> : vector<8x32xf32>
      %347 = tpu.matmul %345, %346, %cst_195 {dimension_numbers = #tpu.dot_dimension_numbers<[1], [0], [0], [1], [0, 0, 1, 1], [], []>} : vector<8x128xbf16>, vector<128x32xbf16>, vector<8x32xf32> -> vector<8x32xf32>
      %c0_196 = arith.constant 0 : index
      %c0_197 = arith.constant 0 : index
      %348 = vector.load %arg11[%c0_196, %c0_197] : memref<1x32xf32, #tpu.memory_space<vmem>>, vector<1x32xf32>
      %349 = vector.broadcast %348 : vector<1x32xf32> to vector<8x32xf32>
      %350 = arith.addf %347, %349 : vector<8x32xf32>
      %351 = tpu.iota {dimensions = array<i32: 1>} : vector<8x32xi32>
      %c0_198 = arith.constant 0 : index
      %c0_199 = arith.constant 0 : index
      %352 = vector.load %arg3[%c0_198, %c0_199] : memref<8x1xi32, #tpu.memory_space<vmem>>, vector<8x1xi32>
      %c8_i32_200 = arith.constant 8 : i32
      %353 = vector.broadcast %c8_i32_200 : i32 to vector<8x1xi32>
      %354 = arith.muli %352, %353 : vector<8x1xi32>
      %355 = vector.broadcast %354 : vector<8x1xi32> to vector<8x32xi32>
      %356 = arith.cmpi sge, %351, %355 : vector<8x32xi32>
      %c8_i32_201 = arith.constant 8 : i32
      %357 = vector.broadcast %c8_i32_201 : i32 to vector<8x1xi32>
      %358 = arith.addi %354, %357 : vector<8x1xi32>
      %359 = vector.broadcast %358 : vector<8x1xi32> to vector<8x32xi32>
      %360 = arith.cmpi slt, %351, %359 : vector<8x32xi32>
      %361 = arith.andi %356, %360 : vector<8x32xi1>
      %cst_202 = arith.constant 0.000000e+00 : f32
      %362 = vector.broadcast %cst_202 : f32 to vector<8x32xf32>
      %363 = arith.select %361, %350, %362 : vector<8x32xi1>, vector<8x32xf32>
      %c0_203 = arith.constant 0 : index
      %c0_204 = arith.constant 0 : index
      %364 = vector.load %arg12[%c0_203, %c0_204] : memref<32x8xf32, #tpu.memory_space<vmem>>, vector<32x8xf32>
      %cst_205 = arith.constant dense<0.000000e+00> : vector<8x8xf32>
      %365 = tpu.matmul %363, %364, %cst_205 {dimension_numbers = #tpu.dot_dimension_numbers<[1], [0], [0], [1], [0, 0, 1, 1], [], []>} : vector<8x32xf32>, vector<32x8xf32>, vector<8x8xf32> -> vector<8x8xf32>
      %c0_206 = arith.constant 0 : index
      %c0_207 = arith.constant 0 : index
      %366 = vector.load %arg13[%c0_206, %c0_207] : memref<8x8xf32, #tpu.memory_space<vmem>>, vector<8x8xf32>
      tpu.vector_store %arg13[%c0_206, %c0_207], %365 {strides = array<i32>} : memref<8x8xf32, #tpu.memory_space<vmem>>, vector<8x8xf32>,
    } else {
    }
    return
  }
  func.func @transform_0(%arg0: i32, %arg1: i32) -> (i32, i32, i32) {
    %c0_i32 = arith.constant 0 : i32
    %c0_i32_0 = arith.constant 0 : i32
    return %arg1, %arg0, %c0_i32 : i32, i32, i32
  }
  func.func @transform_1(%arg0: i32, %arg1: i32) -> (i32, i32) {
    %c0_i32 = arith.constant 0 : i32
    %c0_i32_0 = arith.constant 0 : i32
    return %arg0, %c0_i32 : i32, i32
  }
  func.func @transform_2(%arg0: i32, %arg1: i32) -> (i32, i32) {
    %c0_i32 = arith.constant 0 : i32
    %c0_i32_0 = arith.constant 0 : i32
    %c0_i32_1 = arith.constant 0 : i32
    return %c0_i32, %c0_i32_0 : i32, i32
  }
  func.func @transform_3(%arg0: i32, %arg1: i32) -> (i32, i32) {
    %c0_i32 = arith.constant 0 : i32
    %c0_i32_0 = arith.constant 0 : i32
    %c0_i32_1 = arith.constant 0 : i32
    return %c0_i32, %c0_i32_0 : i32, i32
  }
  func.func @transform_4(%arg0: i32, %arg1: i32) -> (i32, i32) {
    %c0_i32 = arith.constant 0 : i32
    %c0_i32_0 = arith.constant 0 : i32
    %c0_i32_1 = arith.constant 0 : i32
    return %c0_i32, %c0_i32_0 : i32, i32
  }
  func.func @transform_5(%arg0: i32, %arg1: i32) -> (i32, i32) {
    %c0_i32 = arith.constant 0 : i32
    %c0_i32_0 = arith.constant 0 : i32
    %c0_i32_1 = arith.constant 0 : i32
    return %c0_i32, %c0_i32_0 : i32, i32
  }
  func.func @transform_6(%arg0: i32, %arg1: i32) -> (i32, i32) {
    %c0_i32 = arith.constant 0 : i32
    %c0_i32_0 = arith.constant 0 : i32
    %c0_i32_1 = arith.constant 0 : i32
    return %c0_i32, %c0_i32_0 : i32, i32
  }
  func.func @transform_7(%arg0: i32, %arg1: i32) -> (i32, i32) {
    %c0_i32 = arith.constant 0 : i32
    %c0_i32_0 = arith.constant 0 : i32
    %c0_i32_1 = arith.constant 0 : i32
    return %c0_i32, %c0_i32_0 : i32, i32
  }
  func.func @transform_8(%arg0: i32, %arg1: i32) -> (i32, i32) {
    %c0_i32 = arith.constant 0 : i32
    %c0_i32_0 = arith.constant 0 : i32
    %c0_i32_1 = arith.constant 0 : i32
    return %c0_i32, %c0_i32_0 : i32, i32
  }
  func.func @transform_9(%arg0: i32, %arg1: i32) -> (i32, i32) {
    %c0_i32 = arith.constant 0 : i32
    %c0_i32_0 = arith.constant 0 : i32
    %c0_i32_1 = arith.constant 0 : i32
    return %c0_i32, %c0_i32_0 : i32, i32
  }
  func.func @transform_10(%arg0: i32, %arg1: i32) -> (i32, i32) {
    %c0_i32 = arith.constant 0 : i32
    %c0_i32_0 = arith.constant 0 : i32
    %c0_i32_1 = arith.constant 0 : i32
    return %c0_i32, %c0_i32_0 : i32, i32
  }
  func.func @transform_11(%arg0: i32, %arg1: i32) -> (i32, i32) {
    %c0_i32 = arith.constant 0 : i32
    %c0_i32_0 = arith.constant 0 : i32
    return %arg0, %c0_i32 : i32, i32
  }
}

</mosaic_0001>

<llo_original>
// kernel: recurrent_network_forward.1
$region0: #{recurrent_network_forward.1}
  #allocation0 [shape = 'u32[]', space=smem, size = 0x4, offset = 0x4, fixed_abs, tag = 'smem constant byte address 0x4 - core index']
  #allocation1 [shape = 'u32[72,128]{1,0:T(1,128)}', space=vmem, size = 0x9000, scoped, tag = 'internal scratch']
  #allocation2 [shape = 'f32[8,8,128]{2,1,0:T(8,128)}', space=vmem, size = 0x8000, scoped, tag = 'scratch operand']
  #allocation3 [shape = 'f32[8,8,128]{2,1,0:T(8,128)}', space=vmem, size = 0x8000, scoped, tag = 'scratch operand']
  #allocation4 [shape = 'f32[8,8,128]{2,1,0:T(8,128)}', space=vmem, size = 0x8000, scoped, tag = 'scratch operand']
  #allocation5 [shape = 'f32[8,128]{1,0:T(8,128)}', space=vmem, size = 0x1000, scoped, tag = 'scratch operand']
  %s0 = inlined_call_operand.vmem [shape: bf16[8,8,32], index: 0, kind: input, shape index: {}]
  %s1 = inlined_call_operand.vmem [shape: s32[8,1], index: 1, kind: input, shape index: {}]
  %s2 = inlined_call_operand.vmem [shape: bf16[32,384], index: 2, kind: input, shape index: {}]
  %s3 = inlined_call_operand.vmem [shape: f32[1,384], index: 3, kind: input, shape index: {}]
  %s4 = inlined_call_operand.vmem [shape: bf16[128,128], index: 4, kind: input, shape index: {}]
  %s5 = inlined_call_operand.vmem [shape: bf16[128,128], index: 5, kind: input, shape index: {}]
  %s6 = inlined_call_operand.vmem [shape: bf16[128,128], index: 6, kind: input, shape index: {}]
  %s7 = inlined_call_operand.vmem [shape: f32[1,128], index: 7, kind: input, shape index: {}]
  %s8 = inlined_call_operand.vmem [shape: bf16[128,32], index: 8, kind: input, shape index: {}]
  %s9 = inlined_call_operand.vmem [shape: f32[1,32], index: 9, kind: input, shape index: {}]
  %s10 = inlined_call_operand.vmem [shape: f32[32,8], index: 10, kind: input, shape index: {}]
  %s11 = inlined_call_operand.vmem [shape: f32[8,8], index: 11, kind: output, shape index: {}]
  %s12 = sld [smem:[#allocation0]]
  $region62: #{recurrent_network_forward.1} parent=0
    _
  %s14 = ssub.s32 1, %s12
  %s15 = scalar_select 0, %s14, %s12
  // Predicated region
  $region2: #{recurrent_network_forward.1} parent=0 // pred_check
    _
  $region3: #{recurrent_network_forward.1} parent=0 // pred_check_branch
    %17 = sbr.rel (0) target = $region5
  $region4: #{recurrent_network_forward.1} parent=0 // pred_region
    _
  $region5: #{recurrent_network_forward.1} parent=0 // pred_fallthru
    _
  // Predicated region
  $region6: #{recurrent_network_forward.1} parent=0 // pred_check
    _
  $region7: #{recurrent_network_forward.1} parent=0 // pred_check_branch
    %19 = sbr.rel (0) target = $region9
  $region8: #{recurrent_network_forward.1} parent=0 // pred_region
    _
  $region9: #{recurrent_network_forward.1} parent=0 // pred_fallthru
    _
  // Predicated region
  $region10: #{recurrent_network_forward.1} parent=0 // pred_check
    _
  $region11: #{recurrent_network_forward.1} parent=0 // pred_check_branch
    %21 = sbr.rel (0) target = $region13
  $region12: #{recurrent_network_forward.1} parent=0 // pred_region
    _
  $region13: #{recurrent_network_forward.1} parent=0 // pred_fallthru
    _
  // Predicated region
  $region14: #{recurrent_network_forward.1} parent=0 // pred_check
    _
  $region15: #{recurrent_network_forward.1} parent=0 // pred_check_branch
    %23 = sbr.rel (0) target = $region17
  $region16: #{recurrent_network_forward.1} parent=0 // pred_region
    _
  $region17: #{recurrent_network_forward.1} parent=0 // pred_fallthru
    _
  // Predicated region
  $region18: #{recurrent_network_forward.1} parent=0 // pred_check
    _
  $region19: #{recurrent_network_forward.1} parent=0 // pred_check_branch
    %25 = sbr.rel (0) target = $region21
  $region20: #{recurrent_network_forward.1} parent=0 // pred_region
    _
  $region21: #{recurrent_network_forward.1} parent=0 // pred_fallthru
    _
  // Predicated region
  $region22: #{recurrent_network_forward.1} parent=0 // pred_check
    _
  $region23: #{recurrent_network_forward.1} parent=0 // pred_check_branch
    %27 = sbr.rel (0) target = $region25
  $region24: #{recurrent_network_forward.1} parent=0 // pred_region
    _
  $region25: #{recurrent_network_forward.1} parent=0 // pred_fallthru
    _
  // Predicated region
  $region26: #{recurrent_network_forward.1} parent=0 // pred_check
    _
  $region27: #{recurrent_network_forward.1} parent=0 // pred_check_branch
    %29 = sbr.rel (0) target = $region29
  $region28: #{recurrent_network_forward.1} parent=0 // pred_region
    _
  $region29: #{recurrent_network_forward.1} parent=0 // pred_fallthru
    _
  // Predicated region
  $region30: #{recurrent_network_forward.1} parent=0 // pred_check
    _
  $region31: #{recurrent_network_forward.1} parent=0 // pred_check_branch
    %31 = sbr.rel (0) target = $region33
  $region32: #{recurrent_network_forward.1} parent=0 // pred_region
    _
  $region33: #{recurrent_network_forward.1} parent=0 // pred_fallthru
    _
  // Predicated region
  $region34: #{recurrent_network_forward.1} parent=0 // pred_check
    _
  $region35: #{recurrent_network_forward.1} parent=0 // pred_check_branch
    %33 = sbr.rel (0) target = $region37
  $region36: #{recurrent_network_forward.1} parent=0 // pred_region
    _
  $region37: #{recurrent_network_forward.1} parent=0 // pred_fallthru
    _
  // Predicated region
  $region38: #{recurrent_network_forward.1} parent=0 // pred_check
    _
  $region39: #{recurrent_network_forward.1} parent=0 // pred_check_branch
    %35 = sbr.rel (0) target = $region41
  $region40: #{recurrent_network_forward.1} parent=0 // pred_region
    _
  $region41: #{recurrent_network_forward.1} parent=0 // pred_fallthru
    _
  // Predicated region
  $region42: #{recurrent_network_forward.1} parent=0 // pred_check
    _
  $region43: #{recurrent_network_forward.1} parent=0 // pred_check_branch
    %37 = sbr.rel (0) target = $region45
  $region44: #{recurrent_network_forward.1} parent=0 // pred_region
    _
  $region45: #{recurrent_network_forward.1} parent=0 // pred_fallthru
    _
  %p39 = scmp.eq.s32.totalorder 0, 0
  // Predicated region
  $region46: #{recurrent_network_forward.1} parent=0 // pred_check
    %p40 = pneg %p39
  $region47: #{recurrent_network_forward.1} parent=0 // pred_check_branch
    %42 = sbr.rel (%p40) target = $region49
  $region48: #{recurrent_network_forward.1} parent=0 // pred_region
    %43 = vst [vmem:[#allocation5] sm:$0xff] 0.0
  $region49: #{recurrent_network_forward.1} parent=0 // pred_fallthru
    _
  %v44 = vld [vmem:[%s0] sm:$0xf]
  %v45 = vld [vmem:[%s0 + $0x4] sm:$0xf]
  %v46 = vld [vmem:[%s0 + $0x8] sm:$0xf]
  %v47 = vld [vmem:[%s0 + $0xc] sm:$0xf]
  %v48 = vld [vmem:[%s0 + $0x10] sm:$0xf]
  %v49 = vld [vmem:[%s0 + $0x14] sm:$0xf]
  %v50 = vld [vmem:[%s0 + $0x18] sm:$0xf]
  %v51 = vld [vmem:[%s0 + $0x1c] sm:$0xf]
  %v52 = vld [vmem:[%s2] sm:$0xff]
  %v53 = vld [vmem:[%s2 + $0x8] sm:$0xf]
  %v54 = vld [vmem:[%s2 + $0xc] sm:$0xff]
  %v55 = vld [vmem:[%s2 + $0x14] sm:$0xf]
  %v56 = vld [vmem:[%s2 + $0x18] sm:$0xff]
  %v57 = vld [vmem:[%s2 + $0x20] sm:$0xf]
  %v58 = vld [vmem:[%s2 + $0x24] sm:$0xff]
  %v59 = vld [vmem:[%s2 + $0x2c] sm:$0xf]
  %v60 = vld [vmem:[%s3] sm:$0x7]
  %v62 = vperm.slane %v60, 0
  %v63 = vperm.slane %v60, 1
  %v64 = vperm.slane %v60, 2
  %v76 = vunpack.c.l.b16 %v44
  %v77 = vunpack.c.l.b16 %v45
  %v78 = vunpack.c.l.b16 %v46
  %v79 = vunpack.c.l.b16 %v47
  %v80 = vunpack.c.l.b16 %v48
  %v81 = vunpack.c.l.b16 %v49
  %v82 = vunpack.c.l.b16 %v50
  %v83 = vunpack.c.l.b16 %v51
  %v84 = vpack.c.b16 %v77, %v76
  %v85 = vpack.c.b16 %v79, %v78
  %v86 = vpack.c.b16 %v81, %v80
  %v87 = vpack.c.b16 %v83, %v82
  %v96 = vunpack.c.l.b16 %v52
  %v97 = vunpack.c.h.b16 %v52
  %v98 = vunpack.c.l.b16 %v53
  %v99 = vunpack.c.l.b16 %v54
  %v100 = vunpack.c.h.b16 %v54
  %v101 = vunpack.c.l.b16 %v55
  %v102 = vunpack.c.l.b16 %v56
  %v103 = vunpack.c.h.b16 %v56
  %v104 = vunpack.c.l.b16 %v57
  %v105 = vunpack.c.l.b16 %v58
  %v106 = vunpack.c.h.b16 %v58
  %v107 = vunpack.c.l.b16 %v59
  %v108 = vpack.c.b16 %v99, %v96
  %v109 = vpack.c.b16 %v100, %v97
  %v110 = vpack.c.b16 %v101, %v98
  %v111 = vpack.c.b16 %v105, %v102
  %v112 = vpack.c.b16 %v106, %v103
  %v113 = vpack.c.b16 %v107, %v104
  %vm120 = vcmask 261120
  %v122 = vsel %vm120, %v84, 0
  %v125 = vsel %vm120, %v85, 0
  %v128 = vsel %vm120, %v86, 0
  %v131 = vsel %vm120, %v87, 0
  %133 = vmatpush.bf16.msra.mxu0 0
  %134 = vmatpush.bf16.msra.mxu0 0
  %135 = vmatpush.bf16.msra.mxu0 0
  %136 = vmatpush.bf16.msra.mxu0 0
  %137 = vmatpush.bf16.msra.mxu0 0
  %138 = vmatpush.bf16.msra.mxu0 0
  %139 = vmatpush.bf16.msra.mxu0 %v111
  %140 = vmatpush.bf16.msra.mxu0 %v108
  %141 = vmatmul.bf16.gmra.mxu0 %v122
  %v142 = vpop.f32.mrf.mxu0
  %v143 = vadd.f32 %v62, %v142
  %v144 = vpop.f32.mrf.mxu0
  %v145 = vadd.f32 %v62, %v144
  %146 = vmatmul.bf16.gmra.mxu0 %v125
  %v147 = vpop.f32.mrf.mxu0
  %v148 = vadd.f32 %v62, %v147
  %v149 = vpop.f32.mrf.mxu0
  %v150 = vadd.f32 %v62, %v149
  %151 = vmatmul.bf16.gmra.mxu0 %v128
  %v152 = vpop.f32.mrf.mxu0
  %v153 = vadd.f32 %v62, %v152
  %v154 = vpop.f32.mrf.mxu0
  %v155 = vadd.f32 %v62, %v154
  %156 = vmatmul.bf16.gmra.mxu0 %v131
  %v157 = vpop.f32.mrf.mxu0
  %v158 = vadd.f32 %v62, %v157
  %v159 = vpop.f32.mrf.mxu0
  %v160 = vadd.f32 %v62, %v159
  %161 = vdwg.mxu0
  %162 = vmatpush.bf16.msra.mxu0 0
  %163 = vmatpush.bf16.msra.mxu0 0
  %164 = vmatpush.bf16.msra.mxu0 0
  %165 = vmatpush.bf16.msra.mxu0 0
  %166 = vmatpush.bf16.msra.mxu0 0
  %167 = vmatpush.bf16.msra.mxu0 0
  %168 = vmatpush.bf16.msra.mxu0 %v112
  %169 = vmatpush.bf16.msra.mxu0 %v109
  %170 = vmatmul.bf16.gmra.mxu0 %v122
  %v171 = vpop.f32.mrf.mxu0
  %v172 = vadd.f32 %v63, %v171
  %v173 = vpop.f32.mrf.mxu0
  %v174 = vadd.f32 %v63, %v173
  %175 = vmatmul.bf16.gmra.mxu0 %v125
  %v176 = vpop.f32.mrf.mxu0
  %v177 = vadd.f32 %v63, %v176
  %v178 = vpop.f32.mrf.mxu0
  %v179 = vadd.f32 %v63, %v178
  %180 = vmatmul.bf16.gmra.mxu0 %v128
  %v181 = vpop.f32.mrf.mxu0
  %v182 = vadd.f32 %v63, %v181
  %v183 = vpop.f32.mrf.mxu0
  %v184 = vadd.f32 %v63, %v183
  %185 = vmatmul.bf16.gmra.mxu0 %v131
  %v186 = vpop.f32.mrf.mxu0
  %v187 = vadd.f32 %v63, %v186
  %v188 = vpop.f32.mrf.mxu0
  %v189 = vadd.f32 %v63, %v188
  %190 = vdwg.mxu0
  %191 = vmatpush.bf16.msra.mxu0 0
  %192 = vmatpush.bf16.msra.mxu0 0
  %193 = vmatpush.bf16.msra.mxu0 0
  %194 = vmatpush.bf16.msra.mxu0 0
  %195 = vmatpush.bf16.msra.mxu0 0
  %196 = vmatpush.bf16.msra.mxu0 0
  %197 = vmatpush.bf16.msra.mxu0 %v113
  %198 = vmatpush.bf16.msra.mxu0 %v110
  %199 = vmatmul.bf16.gmra.mxu0 %v122
  %v200 = vpop.f32.mrf.mxu0
  %v201 = vadd.f32 %v64, %v200
  %v202 = vpop.f32.mrf.mxu0
  %v203 = vadd.f32 %v64, %v202
  %204 = vmatmul.bf16.gmra.mxu0 %v125
  %v205 = vpop.f32.mrf.mxu0
  %v206 = vadd.f32 %v64, %v205
  %v207 = vpop.f32.mrf.mxu0
  %v208 = vadd.f32 %v64, %v207
  %209 = vmatmul.bf16.gmra.mxu0 %v128
  %v210 = vpop.f32.mrf.mxu0
  %v211 = vadd.f32 %v64, %v210
  %v212 = vpop.f32.mrf.mxu0
  %v213 = vadd.f32 %v64, %v212
  %214 = vmatmul.bf16.gmra.mxu0 %v131
  %v215 = vpop.f32.mrf.mxu0
  %v216 = vadd.f32 %v64, %v215
  %v217 = vpop.f32.mrf.mxu0
  %v218 = vadd.f32 %v64, %v217
  %219 = vdwg.mxu0
  %220 = vst [vmem:[#allocation2] sm:$0xff] %v143
  %221 = vst [vmem:[#allocation2 + $0x8] sm:$0xff] %v145
  %222 = vst [vmem:[#allocation2 + $0x10] sm:$0xff] %v148
  %223 = vst [vmem:[#allocation2 + $0x18] sm:$0xff] %v150
  %224 = vst [vmem:[#allocation2 + $0x20] sm:$0xff] %v153
  %225 = vst [vmem:[#allocation2 + $0x28] sm:$0xff] %v155
  %226 = vst [vmem:[#allocation2 + $0x30] sm:$0xff] %v158
  %227 = vst [vmem:[#allocation2 + $0x38] sm:$0xff] %v160
  %228 = vst [vmem:[#allocation3] sm:$0xff] %v172
  %229 = vst [vmem:[#allocation3 + $0x8] sm:$0xff] %v174
  %230 = vst [vmem:[#allocation3 + $0x10] sm:$0xff] %v177
  %231 = vst [vmem:[#allocation3 + $0x18] sm:$0xff] %v179
  %232 = vst [vmem:[#allocation3 + $0x20] sm:$0xff] %v182
  %233 = vst [vmem:[#allocation3 + $0x28] sm:$0xff] %v184
  %234 = vst [vmem:[#allocation3 + $0x30] sm:$0xff] %v187
  %235 = vst [vmem:[#allocation3 + $0x38] sm:$0xff] %v189
  %236 = vst [vmem:[#allocation4] sm:$0xff] %v201
  %237 = vst [vmem:[#allocation4 + $0x8] sm:$0xff] %v203
  %238 = vst [vmem:[#allocation4 + $0x10] sm:$0xff] %v206
  %239 = vst [vmem:[#allocation4 + $0x18] sm:$0xff] %v208
  %240 = vst [vmem:[#allocation4 + $0x20] sm:$0xff] %v211
  %241 = vst [vmem:[#allocation4 + $0x28] sm:$0xff] %v213
  %242 = vst [vmem:[#allocation4 + $0x30] sm:$0xff] %v216
  %243 = vst [vmem:[#allocation4 + $0x38] sm:$0xff] %v218
  %v244 = vld [vmem:[%s7] sm:$0x1]
  %v245 = vld [vmem:[#allocation5] sm:$0xff]
  %v246 = vpack.c.bf16 %v245, %v245
  %v247 = vld [vmem:[#allocation2] sm:$0xff]
  %v248 = vld [vmem:[%s4] sm:$0xf]
  %v249 = vld [vmem:[%s4 + $0x4] sm:$0xf]
  %v250 = vld [vmem:[%s4 + $0x8] sm:$0xf]
  %v251 = vld [vmem:[%s4 + $0xc] sm:$0xf]
  %v252 = vld [vmem:[%s4 + $0x10] sm:$0xf]
  %v253 = vld [vmem:[%s4 + $0x14] sm:$0xf]
  %v254 = vld [vmem:[%s4 + $0x18] sm:$0xf]
  %v255 = vld [vmem:[%s4 + $0x1c] sm:$0xf]
  %v256 = vld [vmem:[%s4 + $0x20] sm:$0xf]
  %v257 = vld [vmem:[%s4 + $0x24] sm:$0xf]
  %v258 = vld [vmem:[%s4 + $0x28] sm:$0xf]
  %v259 = vld [vmem:[%s4 + $0x2c] sm:$0xf]
  %v260 = vld [vmem:[%s4 + $0x30] sm:$0xf]
  %v261 = vld [vmem:[%s4 + $0x34] sm:$0xf]
  %v262 = vld [vmem:[%s4 + $0x38] sm:$0xf]
  %v263 = vld [vmem:[%s4 + $0x3c] sm:$0xf]
  %v280 = vunpack.c.l.b16 %v248
  %v281 = vunpack.c.l.b16 %v249
  %v282 = vunpack.c.l.b16 %v250
  %v283 = vunpack.c.l.b16 %v251
  %v284 = vunpack.c.l.b16 %v252
  %v285 = vunpack.c.l.b16 %v253
  %v286 = vunpack.c.l.b16 %v254
  %v287 = vunpack.c.l.b16 %v255
  %v288 = vunpack.c.l.b16 %v256
  %v289 = vunpack.c.l.b16 %v257
  %v290 = vunpack.c.l.b16 %v258
  %v291 = vunpack.c.l.b16 %v259
  %v292 = vunpack.c.l.b16 %v260
  %v293 = vunpack.c.l.b16 %v261
  %v294 = vunpack.c.l.b16 %v262
  %v295 = vunpack.c.l.b16 %v263
  %v296 = vpack.c.b16 %v281, %v280
  %v297 = vpack.c.b16 %v283, %v282
  %v298 = vpack.c.b16 %v285, %v284
  %v299 = vpack.c.b16 %v287, %v286
  %v300 = vpack.c.b16 %v289, %v288
  %v301 = vpack.c.b16 %v291, %v290
  %v302 = vpack.c.b16 %v293, %v292
  %v303 = vpack.c.b16 %v295, %v294
  %312 = vmatpush.bf16.msra.mxu0 %v303
  %313 = vmatpush.bf16.msra.mxu0 %v302
  %314 = vmatpush.bf16.msra.mxu0 %v301
  %315 = vmatpush.bf16.msra.mxu0 %v300
  %316 = vmatpush.bf16.msra.mxu0 %v299
  %317 = vmatpush.bf16.msra.mxu0 %v298
  %318 = vmatpush.bf16.msra.mxu0 %v297
  %319 = vmatpush.bf16.msra.mxu0 %v296
  %320 = vmatmul.bf16.gmra.mxu0 %v246
  %v321 = vpop.f32.mrf.mxu0
  %v322 = vadd.f32 0.0, %v321
  %v323 = vpop.f32.mrf.mxu0
  %324 = vdwg.mxu0
  %v325 = vadd.f32 %v247, %v322
  %v326 = vmul.f32 %v325, 0.5
  %v327 = vtanh.pop %v326
  %v328 = vadd.f32 %v327, 1.0
  %v329 = vmul.f32 %v328, 0.5
  %v330 = vld [vmem:[#allocation3] sm:$0xff]
  %v331 = vld [vmem:[%s5] sm:$0xf]
  %v332 = vld [vmem:[%s5 + $0x4] sm:$0xf]
  %v333 = vld [vmem:[%s5 + $0x8] sm:$0xf]
  %v334 = vld [vmem:[%s5 + $0xc] sm:$0xf]
  %v335 = vld [vmem:[%s5 + $0x10] sm:$0xf]
  %v336 = vld [vmem:[%s5 + $0x14] sm:$0xf]
  %v337 = vld [vmem:[%s5 + $0x18] sm:$0xf]
  %v338 = vld [vmem:[%s5 + $0x1c] sm:$0xf]
  %v339 = vld [vmem:[%s5 + $0x20] sm:$0xf]
  %v340 = vld [vmem:[%s5 + $0x24] sm:$0xf]
  %v341 = vld [vmem:[%s5 + $0x28] sm:$0xf]
  %v342 = vld [vmem:[%s5 + $0x2c] sm:$0xf]
  %v343 = vld [vmem:[%s5 + $0x30] sm:$0xf]
  %v344 = vld [vmem:[%s5 + $0x34] sm:$0xf]
  %v345 = vld [vmem:[%s5 + $0x38] sm:$0xf]
  %v346 = vld [vmem:[%s5 + $0x3c] sm:$0xf]
  %v363 = vunpack.c.l.b16 %v331
  %v364 = vunpack.c.l.b16 %v332
  %v365 = vunpack.c.l.b16 %v333
  %v366 = vunpack.c.l.b16 %v334
  %v367 = vunpack.c.l.b16 %v335
  %v368 = vunpack.c.l.b16 %v336
  %v369 = vunpack.c.l.b16 %v337
  %v370 = vunpack.c.l.b16 %v338
  %v371 = vunpack.c.l.b16 %v339
  %v372 = vunpack.c.l.b16 %v340
  %v373 = vunpack.c.l.b16 %v341
  %v374 = vunpack.c.l.b16 %v342
  %v375 = vunpack.c.l.b16 %v343
  %v376 = vunpack.c.l.b16 %v344
  %v377 = vunpack.c.l.b16 %v345
  %v378 = vunpack.c.l.b16 %v346
  %v379 = vpack.c.b16 %v364, %v363
  %v380 = vpack.c.b16 %v366, %v365
  %v381 = vpack.c.b16 %v368, %v367
  %v382 = vpack.c.b16 %v370, %v369
  %v383 = vpack.c.b16 %v372, %v371
  %v384 = vpack.c.b16 %v374, %v373
  %v385 = vpack.c.b16 %v376, %v375
  %v386 = vpack.c.b16 %v378, %v377
  %395 = vmatpush.bf16.msra.mxu0 %v386
  %396 = vmatpush.bf16.msra.mxu0 %v385
  %397 = vmatpush.bf16.msra.mxu0 %v384
  %398 = vmatpush.bf16.msra.mxu0 %v383
  %399 = vmatpush.bf16.msra.mxu0 %v382
  %400 = vmatpush.bf16.msra.mxu0 %v381
  %401 = vmatpush.bf16.msra.mxu0 %v380
  %402 = vmatpush.bf16.msra.mxu0 %v379
  %403 = vmatmul.bf16.gmra.mxu0 %v246
  %v404 = vpop.f32.mrf.mxu0
  %v405 = vadd.f32 0.0, %v404
  %v406 = vpop.f32.mrf.mxu0
  %407 = vdwg.mxu0
  %v408 = vadd.f32 %v330, %v405
  %v409 = vmul.f32 %v408, 0.5
  %v410 = vtanh.pop %v409
  %v411 = vadd.f32 %v410, 1.0
  %v412 = vmul.f32 %v411, 0.5
  %v413 = vld [vmem:[%s6] sm:$0xf]
  %v414 = vld [vmem:[%s6 + $0x4] sm:$0xf]
  %v415 = vld [vmem:[%s6 + $0x8] sm:$0xf]
  %v416 = vld [vmem:[%s6 + $0xc] sm:$0xf]
  %v417 = vld [vmem:[%s6 + $0x10] sm:$0xf]
  %v418 = vld [vmem:[%s6 + $0x14] sm:$0xf]
  %v419 = vld [vmem:[%s6 + $0x18] sm:$0xf]
  %v420 = vld [vmem:[%s6 + $0x1c] sm:$0xf]
  %v421 = vld [vmem:[%s6 + $0x20] sm:$0xf]
  %v422 = vld [vmem:[%s6 + $0x24] sm:$0xf]
  %v423 = vld [vmem:[%s6 + $0x28] sm:$0xf]
  %v424 = vld [vmem:[%s6 + $0x2c] sm:$0xf]
  %v425 = vld [vmem:[%s6 + $0x30] sm:$0xf]
  %v426 = vld [vmem:[%s6 + $0x34] sm:$0xf]
  %v427 = vld [vmem:[%s6 + $0x38] sm:$0xf]
  %v428 = vld [vmem:[%s6 + $0x3c] sm:$0xf]
  %v430 = vperm.slane %v244, 0
  %v448 = vunpack.c.l.b16 %v413
  %v449 = vunpack.c.l.b16 %v414
  %v450 = vunpack.c.l.b16 %v415
  %v451 = vunpack.c.l.b16 %v416
  %v452 = vunpack.c.l.b16 %v417
  %v453 = vunpack.c.l.b16 %v418
  %v454 = vunpack.c.l.b16 %v419
  %v455 = vunpack.c.l.b16 %v420
  %v456 = vunpack.c.l.b16 %v421
  %v457 = vunpack.c.l.b16 %v422
  %v458 = vunpack.c.l.b16 %v423
  %v459 = vunpack.c.l.b16 %v424
  %v460 = vunpack.c.l.b16 %v425
  %v461 = vunpack.c.l.b16 %v426
  %v462 = vunpack.c.l.b16 %v427
  %v463 = vunpack.c.l.b16 %v428
  %v464 = vpack.c.b16 %v449, %v448
  %v465 = vpack.c.b16 %v451, %v450
  %v466 = vpack.c.b16 %v453, %v452
  %v467 = vpack.c.b16 %v455, %v454
  %v468 = vpack.c.b16 %v457, %v456
  %v469 = vpack.c.b16 %v459, %v458
  %v470 = vpack.c.b16 %v461, %v460
  %v471 = vpack.c.b16 %v463, %v462
  %480 = vmatpush.bf16.msra.mxu0 %v471
  %481 = vmatpush.bf16.msra.mxu0 %v470
  %482 = vmatpush.bf16.msra.mxu0 %v469
  %483 = vmatpush.bf16.msra.mxu0 %v468
  %484 = vmatpush.bf16.msra.mxu0 %v467
  %485 = vmatpush.bf16.msra.mxu0 %v466
  %486 = vmatpush.bf16.msra.mxu0 %v465
  %487 = vmatpush.bf16.msra.mxu0 %v464
  %488 = vmatmul.bf16.gmra.mxu0 %v246
  %v489 = vpop.f32.mrf.mxu0
  %v490 = vadd.f32 %v430, %v489
  %v491 = vpop.f32.mrf.mxu0
  %492 = vdwg.mxu0
  %v493 = vld [vmem:[#allocation4] sm:$0xff]
  %v494 = vmul.f32 %v329, %v490
  %v495 = vadd.f32 %v493, %v494
  %v496 = vtanh.pop %v495
  %v497 = vsub.f32 %v245, %v496
  %v498 = vmul.f32 %v412, %v497
  %v499 = vadd.f32 %v496, %v498
  %v500 = vpack.c.bf16 %v499, %v499
  %s501 = scalar_lea.vmem [#allocation2], 8
  %v502 = vld [vmem:[%s501] sm:$0xff]
  %503 = vmatpush.bf16.msra.mxu0 %v303
  %504 = vmatpush.bf16.msra.mxu0 %v302
  %505 = vmatpush.bf16.msra.mxu0 %v301
  %506 = vmatpush.bf16.msra.mxu0 %v300
  %507 = vmatpush.bf16.msra.mxu0 %v299
  %508 = vmatpush.bf16.msra.mxu0 %v298
  %509 = vmatpush.bf16.msra.mxu0 %v297
  %510 = vmatpush.bf16.msra.mxu0 %v296
  %511 = vmatmul.bf16.gmra.mxu0 %v500
  %v512 = vpop.f32.mrf.mxu0
  %v513 = vadd.f32 0.0, %v512
  %v514 = vpop.f32.mrf.mxu0
  %515 = vdwg.mxu0
  %v516 = vadd.f32 %v502, %v513
  %v517 = vmul.f32 %v516, 0.5
  %v518 = vtanh.pop %v517
  %v519 = vadd.f32 %v518, 1.0
  %v520 = vmul.f32 %v519, 0.5
  %s521 = scalar_lea.vmem [#allocation3], 8
  %v522 = vld [vmem:[%s521] sm:$0xff]
  %523 = vmatpush.bf16.msra.mxu0 %v386
  %524 = vmatpush.bf16.msra.mxu0 %v385
  %525 = vmatpush.bf16.msra.mxu0 %v384
  %526 = vmatpush.bf16.msra.mxu0 %v383
  %527 = vmatpush.bf16.msra.mxu0 %v382
  %528 = vmatpush.bf16.msra.mxu0 %v381
  %529 = vmatpush.bf16.msra.mxu0 %v380
  %530 = vmatpush.bf16.msra.mxu0 %v379
  %531 = vmatmul.bf16.gmra.mxu0 %v500
  %v532 = vpop.f32.mrf.mxu0
  %v533 = vadd.f32 0.0, %v532
  %v534 = vpop.f32.mrf.mxu0
  %535 = vdwg.mxu0
  %v536 = vadd.f32 %v522, %v533
  %v537 = vmul.f32 %v536, 0.5
  %v538 = vtanh.pop %v537
  %v539 = vadd.f32 %v538, 1.0
  %v540 = vmul.f32 %v539, 0.5
  %541 = vmatpush.bf16.msra.mxu0 %v471
  %542 = vmatpush.bf16.msra.mxu0 %v470
  %543 = vmatpush.bf16.msra.mxu0 %v469
  %544 = vmatpush.bf16.msra.mxu0 %v468
  %545 = vmatpush.bf16.msra.mxu0 %v467
  %546 = vmatpush.bf16.msra.mxu0 %v466
  %547 = vmatpush.bf16.msra.mxu0 %v465
  %548 = vmatpush.bf16.msra.mxu0 %v464
  %549 = vmatmul.bf16.gmra.mxu0 %v500
  %v550 = vpop.f32.mrf.mxu0
  %v551 = vadd.f32 %v430, %v550
  %v552 = vpop.f32.mrf.mxu0
  %553 = vdwg.mxu0
  %s554 = scalar_lea.vmem [#allocation4], 8
  %v555 = vld [vmem:[%s554] sm:$0xff]
  %v556 = vmul.f32 %v520, %v551
  %v557 = vadd.f32 %v555, %v556
  %v558 = vtanh.pop %v557
  %v559 = vsub.f32 %v499, %v558
  %v560 = vmul.f32 %v540, %v559
  %v561 = vadd.f32 %v558, %v560
  %v562 = vpack.c.bf16 %v561, %v561
  %s563 = scalar_lea.vmem [#allocation2], 16
  %v564 = vld [vmem:[%s563] sm:$0xff]
  %565 = vmatpush.bf16.msra.mxu0 %v303
  %566 = vmatpush.bf16.msra.mxu0 %v302
  %567 = vmatpush.bf16.msra.mxu0 %v301
  %568 = vmatpush.bf16.msra.mxu0 %v300
  %569 = vmatpush.bf16.msra.mxu0 %v299
  %570 = vmatpush.bf16.msra.mxu0 %v298
  %571 = vmatpush.bf16.msra.mxu0 %v297
  %572 = vmatpush.bf16.msra.mxu0 %v296
  %573 = vmatmul.bf16.gmra.mxu0 %v562
  %v574 = vpop.f32.mrf.mxu0
  %v575 = vadd.f32 0.0, %v574
  %v576 = vpop.f32.mrf.mxu0
  %577 = vdwg.mxu0
  %v578 = vadd.f32 %v564, %v575
  %v579 = vmul.f32 %v578, 0.5
  %v580 = vtanh.pop %v579
  %v581 = vadd.f32 %v580, 1.0
  %v582 = vmul.f32 %v581, 0.5
  %s583 = scalar_lea.vmem [#allocation3], 16
  %v584 = vld [vmem:[%s583] sm:$0xff]
  %585 = vmatpush.bf16.msra.mxu0 %v386
  %586 = vmatpush.bf16.msra.mxu0 %v385
  %587 = vmatpush.bf16.msra.mxu0 %v384
  %588 = vmatpush.bf16.msra.mxu0 %v383
  %589 = vmatpush.bf16.msra.mxu0 %v382
  %590 = vmatpush.bf16.msra.mxu0 %v381
  %591 = vmatpush.bf16.msra.mxu0 %v380
  %592 = vmatpush.bf16.msra.mxu0 %v379
  %593 = vmatmul.bf16.gmra.mxu0 %v562
  %v594 = vpop.f32.mrf.mxu0
  %v595 = vadd.f32 0.0, %v594
  %v596 = vpop.f32.mrf.mxu0
  %597 = vdwg.mxu0
  %v598 = vadd.f32 %v584, %v595
  %v599 = vmul.f32 %v598, 0.5
  %v600 = vtanh.pop %v599
  %v601 = vadd.f32 %v600, 1.0
  %v602 = vmul.f32 %v601, 0.5
  %603 = vmatpush.bf16.msra.mxu0 %v471
  %604 = vmatpush.bf16.msra.mxu0 %v470
  %605 = vmatpush.bf16.msra.mxu0 %v469
  %606 = vmatpush.bf16.msra.mxu0 %v468
  %607 = vmatpush.bf16.msra.mxu0 %v467
  %608 = vmatpush.bf16.msra.mxu0 %v466
  %609 = vmatpush.bf16.msra.mxu0 %v465
  %610 = vmatpush.bf16.msra.mxu0 %v464
  %611 = vmatmul.bf16.gmra.mxu0 %v562
  %v612 = vpop.f32.mrf.mxu0
  %v613 = vadd.f32 %v430, %v612
  %v614 = vpop.f32.mrf.mxu0
  %615 = vdwg.mxu0
  %s616 = scalar_lea.vmem [#allocation4], 16
  %v617 = vld [vmem:[%s616] sm:$0xff]
  %v618 = vmul.f32 %v582, %v613
  %v619 = vadd.f32 %v617, %v618
  %v620 = vtanh.pop %v619
  %v621 = vsub.f32 %v561, %v620
  %v622 = vmul.f32 %v602, %v621
  %v623 = vadd.f32 %v620, %v622
  %v624 = vpack.c.bf16 %v623, %v623
  %s625 = scalar_lea.vmem [#allocation2], 24
  %v626 = vld [vmem:[%s625] sm:$0xff]
  %627 = vmatpush.bf16.msra.mxu0 %v303
  %628 = vmatpush.bf16.msra.mxu0 %v302
  %629 = vmatpush.bf16.msra.mxu0 %v301
  %630 = vmatpush.bf16.msra.mxu0 %v300
  %631 = vmatpush.bf16.msra.mxu0 %v299
  %632 = vmatpush.bf16.msra.mxu0 %v298
  %633 = vmatpush.bf16.msra.mxu0 %v297
  %634 = vmatpush.bf16.msra.mxu0 %v296
  %635 = vmatmul.bf16.gmra.mxu0 %v624
  %v636 = vpop.f32.mrf.mxu0
  %v637 = vadd.f32 0.0, %v636
  %v638 = vpop.f32.mrf.mxu0
  %639 = vdwg.mxu0
  %v640 = vadd.f32 %v626, %v637
  %v641 = vmul.f32 %v640, 0.5
  %v642 = vtanh.pop %v641
  %v643 = vadd.f32 %v642, 1.0
  %v644 = vmul.f32 %v643, 0.5
  %s645 = scalar_lea.vmem [#allocation3], 24
  %v646 = vld [vmem:[%s645] sm:$0xff]
  %647 = vmatpush.bf16.msra.mxu0 %v386
  %648 = vmatpush.bf16.msra.mxu0 %v385
  %649 = vmatpush.bf16.msra.mxu0 %v384
  %650 = vmatpush.bf16.msra.mxu0 %v383
  %651 = vmatpush.bf16.msra.mxu0 %v382
  %652 = vmatpush.bf16.msra.mxu0 %v381
  %653 = vmatpush.bf16.msra.mxu0 %v380
  %654 = vmatpush.bf16.msra.mxu0 %v379
  %655 = vmatmul.bf16.gmra.mxu0 %v624
  %v656 = vpop.f32.mrf.mxu0
  %v657 = vadd.f32 0.0, %v656
  %v658 = vpop.f32.mrf.mxu0
  %659 = vdwg.mxu0
  %v660 = vadd.f32 %v646, %v657
  %v661 = vmul.f32 %v660, 0.5
  %v662 = vtanh.pop %v661
  %v663 = vadd.f32 %v662, 1.0
  %v664 = vmul.f32 %v663, 0.5
  %665 = vmatpush.bf16.msra.mxu0 %v471
  %666 = vmatpush.bf16.msra.mxu0 %v470
  %667 = vmatpush.bf16.msra.mxu0 %v469
  %668 = vmatpush.bf16.msra.mxu0 %v468
  %669 = vmatpush.bf16.msra.mxu0 %v467
  %670 = vmatpush.bf16.msra.mxu0 %v466
  %671 = vmatpush.bf16.msra.mxu0 %v465
  %672 = vmatpush.bf16.msra.mxu0 %v464
  %673 = vmatmul.bf16.gmra.mxu0 %v624
  %v674 = vpop.f32.mrf.mxu0
  %v675 = vadd.f32 %v430, %v674
  %v676 = vpop.f32.mrf.mxu0
  %677 = vdwg.mxu0
  %s678 = scalar_lea.vmem [#allocation4], 24
  %v679 = vld [vmem:[%s678] sm:$0xff]
  %v680 = vmul.f32 %v644, %v675
  %v681 = vadd.f32 %v679, %v680
  %v682 = vtanh.pop %v681
  %v683 = vsub.f32 %v623, %v682
  %v684 = vmul.f32 %v664, %v683
  %v685 = vadd.f32 %v682, %v684
  %v686 = vpack.c.bf16 %v685, %v685
  %s687 = scalar_lea.vmem [#allocation2], 32
  %v688 = vld [vmem:[%s687] sm:$0xff]
  %689 = vmatpush.bf16.msra.mxu0 %v303
  %690 = vmatpush.bf16.msra.mxu0 %v302
  %691 = vmatpush.bf16.msra.mxu0 %v301
  %692 = vmatpush.bf16.msra.mxu0 %v300
  %693 = vmatpush.bf16.msra.mxu0 %v299
  %694 = vmatpush.bf16.msra.mxu0 %v298
  %695 = vmatpush.bf16.msra.mxu0 %v297
  %696 = vmatpush.bf16.msra.mxu0 %v296
  %697 = vmatmul.bf16.gmra.mxu0 %v686
  %v698 = vpop.f32.mrf.mxu0
  %v699 = vadd.f32 0.0, %v698
  %v700 = vpop.f32.mrf.mxu0
  %701 = vdwg.mxu0
  %v702 = vadd.f32 %v688, %v699
  %v703 = vmul.f32 %v702, 0.5
  %v704 = vtanh.pop %v703
  %v705 = vadd.f32 %v704, 1.0
  %v706 = vmul.f32 %v705, 0.5
  %s707 = scalar_lea.vmem [#allocation3], 32
  %v708 = vld [vmem:[%s707] sm:$0xff]
  %709 = vmatpush.bf16.msra.mxu0 %v386
  %710 = vmatpush.bf16.msra.mxu0 %v385
  %711 = vmatpush.bf16.msra.mxu0 %v384
  %712 = vmatpush.bf16.msra.mxu0 %v383
  %713 = vmatpush.bf16.msra.mxu0 %v382
  %714 = vmatpush.bf16.msra.mxu0 %v381
  %715 = vmatpush.bf16.msra.mxu0 %v380
  %716 = vmatpush.bf16.msra.mxu0 %v379
  %717 = vmatmul.bf16.gmra.mxu0 %v686
  %v718 = vpop.f32.mrf.mxu0
  %v719 = vadd.f32 0.0, %v718
  %v720 = vpop.f32.mrf.mxu0
  %721 = vdwg.mxu0
  %v722 = vadd.f32 %v708, %v719
  %v723 = vmul.f32 %v722, 0.5
  %v724 = vtanh.pop %v723
  %v725 = vadd.f32 %v724, 1.0
  %v726 = vmul.f32 %v725, 0.5
  %727 = vmatpush.bf16.msra.mxu0 %v471
  %728 = vmatpush.bf16.msra.mxu0 %v470
  %729 = vmatpush.bf16.msra.mxu0 %v469
  %730 = vmatpush.bf16.msra.mxu0 %v468
  %731 = vmatpush.bf16.msra.mxu0 %v467
  %732 = vmatpush.bf16.msra.mxu0 %v466
  %733 = vmatpush.bf16.msra.mxu0 %v465
  %734 = vmatpush.bf16.msra.mxu0 %v464
  %735 = vmatmul.bf16.gmra.mxu0 %v686
  %v736 = vpop.f32.mrf.mxu0
  %v737 = vadd.f32 %v430, %v736
  %v738 = vpop.f32.mrf.mxu0
  %739 = vdwg.mxu0
  %s740 = scalar_lea.vmem [#allocation4], 32
  %v741 = vld [vmem:[%s740] sm:$0xff]
  %v742 = vmul.f32 %v706, %v737
  %v743 = vadd.f32 %v741, %v742
  %v744 = vtanh.pop %v743
  %v745 = vsub.f32 %v685, %v744
  %v746 = vmul.f32 %v726, %v745
  %v747 = vadd.f32 %v744, %v746
  %v748 = vpack.c.bf16 %v747, %v747
  %s749 = scalar_lea.vmem [#allocation2], 40
  %v750 = vld [vmem:[%s749] sm:$0xff]
  %751 = vmatpush.bf16.msra.mxu0 %v303
  %752 = vmatpush.bf16.msra.mxu0 %v302
  %753 = vmatpush.bf16.msra.mxu0 %v301
  %754 = vmatpush.bf16.msra.mxu0 %v300
  %755 = vmatpush.bf16.msra.mxu0 %v299
  %756 = vmatpush.bf16.msra.mxu0 %v298
  %757 = vmatpush.bf16.msra.mxu0 %v297
  %758 = vmatpush.bf16.msra.mxu0 %v296
  %759 = vmatmul.bf16.gmra.mxu0 %v748
  %v760 = vpop.f32.mrf.mxu0
  %v761 = vadd.f32 0.0, %v760
  %v762 = vpop.f32.mrf.mxu0
  %763 = vdwg.mxu0
  %v764 = vadd.f32 %v750, %v761
  %v765 = vmul.f32 %v764, 0.5
  %v766 = vtanh.pop %v765
  %v767 = vadd.f32 %v766, 1.0
  %v768 = vmul.f32 %v767, 0.5
  %s769 = scalar_lea.vmem [#allocation3], 40
  %v770 = vld [vmem:[%s769] sm:$0xff]
  %771 = vmatpush.bf16.msra.mxu0 %v386
  %772 = vmatpush.bf16.msra.mxu0 %v385
  %773 = vmatpush.bf16.msra.mxu0 %v384
  %774 = vmatpush.bf16.msra.mxu0 %v383
  %775 = vmatpush.bf16.msra.mxu0 %v382
  %776 = vmatpush.bf16.msra.mxu0 %v381
  %777 = vmatpush.bf16.msra.mxu0 %v380
  %778 = vmatpush.bf16.msra.mxu0 %v379
  %779 = vmatmul.bf16.gmra.mxu0 %v748
  %v780 = vpop.f32.mrf.mxu0
  %v781 = vadd.f32 0.0, %v780
  %v782 = vpop.f32.mrf.mxu0
  %783 = vdwg.mxu0
  %v784 = vadd.f32 %v770, %v781
  %v785 = vmul.f32 %v784, 0.5
  %v786 = vtanh.pop %v785
  %v787 = vadd.f32 %v786, 1.0
  %v788 = vmul.f32 %v787, 0.5
  %789 = vmatpush.bf16.msra.mxu0 %v471
  %790 = vmatpush.bf16.msra.mxu0 %v470
  %791 = vmatpush.bf16.msra.mxu0 %v469
  %792 = vmatpush.bf16.msra.mxu0 %v468
  %793 = vmatpush.bf16.msra.mxu0 %v467
  %794 = vmatpush.bf16.msra.mxu0 %v466
  %795 = vmatpush.bf16.msra.mxu0 %v465
  %796 = vmatpush.bf16.msra.mxu0 %v464
  %797 = vmatmul.bf16.gmra.mxu0 %v748
  %v798 = vpop.f32.mrf.mxu0
  %v799 = vadd.f32 %v430, %v798
  %v800 = vpop.f32.mrf.mxu0
  %801 = vdwg.mxu0
  %s802 = scalar_lea.vmem [#allocation4], 40
  %v803 = vld [vmem:[%s802] sm:$0xff]
  %v804 = vmul.f32 %v768, %v799
  %v805 = vadd.f32 %v803, %v804
  %v806 = vtanh.pop %v805
  %v807 = vsub.f32 %v747, %v806
  %v808 = vmul.f32 %v788, %v807
  %v809 = vadd.f32 %v806, %v808
  %v810 = vpack.c.bf16 %v809, %v809
  %s811 = scalar_lea.vmem [#allocation2], 48
  %v812 = vld [vmem:[%s811] sm:$0xff]
  %813 = vmatpush.bf16.msra.mxu0 %v303
  %814 = vmatpush.bf16.msra.mxu0 %v302
  %815 = vmatpush.bf16.msra.mxu0 %v301
  %816 = vmatpush.bf16.msra.mxu0 %v300
  %817 = vmatpush.bf16.msra.mxu0 %v299
  %818 = vmatpush.bf16.msra.mxu0 %v298
  %819 = vmatpush.bf16.msra.mxu0 %v297
  %820 = vmatpush.bf16.msra.mxu0 %v296
  %821 = vmatmul.bf16.gmra.mxu0 %v810
  %v822 = vpop.f32.mrf.mxu0
  %v823 = vadd.f32 0.0, %v822
  %v824 = vpop.f32.mrf.mxu0
  %825 = vdwg.mxu0
  %v826 = vadd.f32 %v812, %v823
  %v827 = vmul.f32 %v826, 0.5
  %v828 = vtanh.pop %v827
  %v829 = vadd.f32 %v828, 1.0
  %v830 = vmul.f32 %v829, 0.5
  %s831 = scalar_lea.vmem [#allocation3], 48
  %v832 = vld [vmem:[%s831] sm:$0xff]
  %833 = vmatpush.bf16.msra.mxu0 %v386
  %834 = vmatpush.bf16.msra.mxu0 %v385
  %835 = vmatpush.bf16.msra.mxu0 %v384
  %836 = vmatpush.bf16.msra.mxu0 %v383
  %837 = vmatpush.bf16.msra.mxu0 %v382
  %838 = vmatpush.bf16.msra.mxu0 %v381
  %839 = vmatpush.bf16.msra.mxu0 %v380
  %840 = vmatpush.bf16.msra.mxu0 %v379
  %841 = vmatmul.bf16.gmra.mxu0 %v810
  %v842 = vpop.f32.mrf.mxu0
  %v843 = vadd.f32 0.0, %v842
  %v844 = vpop.f32.mrf.mxu0
  %845 = vdwg.mxu0
  %v846 = vadd.f32 %v832, %v843
  %v847 = vmul.f32 %v846, 0.5
  %v848 = vtanh.pop %v847
  %v849 = vadd.f32 %v848, 1.0
  %v850 = vmul.f32 %v849, 0.5
  %851 = vmatpush.bf16.msra.mxu0 %v471
  %852 = vmatpush.bf16.msra.mxu0 %v470
  %853 = vmatpush.bf16.msra.mxu0 %v469
  %854 = vmatpush.bf16.msra.mxu0 %v468
  %855 = vmatpush.bf16.msra.mxu0 %v467
  %856 = vmatpush.bf16.msra.mxu0 %v466
  %857 = vmatpush.bf16.msra.mxu0 %v465
  %858 = vmatpush.bf16.msra.mxu0 %v464
  %859 = vmatmul.bf16.gmra.mxu0 %v810
  %v860 = vpop.f32.mrf.mxu0
  %v861 = vadd.f32 %v430, %v860
  %v862 = vpop.f32.mrf.mxu0
  %863 = vdwg.mxu0
  %s864 = scalar_lea.vmem [#allocation4], 48
  %v865 = vld [vmem:[%s864] sm:$0xff]
  %v866 = vmul.f32 %v830, %v861
  %v867 = vadd.f32 %v865, %v866
  %v868 = vtanh.pop %v867
  %v869 = vsub.f32 %v809, %v868
  %v870 = vmul.f32 %v850, %v869
  %v871 = vadd.f32 %v868, %v870
  %v872 = vpack.c.bf16 %v871, %v871
  %s873 = scalar_lea.vmem [#allocation2], 56
  %v874 = vld [vmem:[%s873] sm:$0xff]
  %875 = vmatpush.bf16.msra.mxu0 %v303
  %876 = vmatpush.bf16.msra.mxu0 %v302
  %877 = vmatpush.bf16.msra.mxu0 %v301
  %878 = vmatpush.bf16.msra.mxu0 %v300
  %879 = vmatpush.bf16.msra.mxu0 %v299
  %880 = vmatpush.bf16.msra.mxu0 %v298
  %881 = vmatpush.bf16.msra.mxu0 %v297
  %882 = vmatpush.bf16.msra.mxu0 %v296
  %883 = vmatmul.bf16.gmra.mxu0 %v872
  %v884 = vpop.f32.mrf.mxu0
  %v885 = vadd.f32 0.0, %v884
  %v886 = vpop.f32.mrf.mxu0
  %887 = vdwg.mxu0
  %v888 = vadd.f32 %v874, %v885
  %v889 = vmul.f32 %v888, 0.5
  %v890 = vtanh.pop %v889
  %v891 = vadd.f32 %v890, 1.0
  %v892 = vmul.f32 %v891, 0.5
  %s893 = scalar_lea.vmem [#allocation3], 56
  %v894 = vld [vmem:[%s893] sm:$0xff]
  %895 = vmatpush.bf16.msra.mxu0 %v386
  %896 = vmatpush.bf16.msra.mxu0 %v385
  %897 = vmatpush.bf16.msra.mxu0 %v384
  %898 = vmatpush.bf16.msra.mxu0 %v383
  %899 = vmatpush.bf16.msra.mxu0 %v382
  %900 = vmatpush.bf16.msra.mxu0 %v381
  %901 = vmatpush.bf16.msra.mxu0 %v380
  %902 = vmatpush.bf16.msra.mxu0 %v379
  %903 = vmatmul.bf16.gmra.mxu0 %v872
  %v904 = vpop.f32.mrf.mxu0
  %v905 = vadd.f32 0.0, %v904
  %v906 = vpop.f32.mrf.mxu0
  %907 = vdwg.mxu0
  %v908 = vadd.f32 %v894, %v905
  %v909 = vmul.f32 %v908, 0.5
  %v910 = vtanh.pop %v909
  %v911 = vadd.f32 %v910, 1.0
  %v912 = vmul.f32 %v911, 0.5
  %913 = vmatpush.bf16.msra.mxu0 %v471
  %914 = vmatpush.bf16.msra.mxu0 %v470
  %915 = vmatpush.bf16.msra.mxu0 %v469
  %916 = vmatpush.bf16.msra.mxu0 %v468
  %917 = vmatpush.bf16.msra.mxu0 %v467
  %918 = vmatpush.bf16.msra.mxu0 %v466
  %919 = vmatpush.bf16.msra.mxu0 %v465
  %920 = vmatpush.bf16.msra.mxu0 %v464
  %921 = vmatmul.bf16.gmra.mxu0 %v872
  %v922 = vpop.f32.mrf.mxu0
  %v923 = vadd.f32 %v430, %v922
  %v924 = vpop.f32.mrf.mxu0
  %925 = vdwg.mxu0
  %s926 = scalar_lea.vmem [#allocation4], 56
  %v927 = vld [vmem:[%s926] sm:$0xff]
  %v928 = vmul.f32 %v892, %v923
  %v929 = vadd.f32 %v927, %v928
  %v930 = vtanh.pop %v929
  %v931 = vsub.f32 %v871, %v930
  %v932 = vmul.f32 %v912, %v931
  %v933 = vadd.f32 %v930, %v932
  %934 = vst [vmem:[#allocation5] sm:$0xff] %v933
  // Predicated region
  $region50: #{recurrent_network_forward.1} parent=0 // pred_check
    %p935 = pneg %p39
  $region51: #{recurrent_network_forward.1} parent=0 // pred_check_branch
    %937 = sbr.rel (%p935) target = $region53
  $region52: #{recurrent_network_forward.1} parent=0 // pred_region
    %v938 = vpack.c.bf16 %v933, %v933
    %v939 = vld [vmem:[%s8] sm:$0xf]
    %v940 = vld [vmem:[%s8 + $0x4] sm:$0xf]
    %v941 = vld [vmem:[%s8 + $0x8] sm:$0xf]
    %v942 = vld [vmem:[%s8 + $0xc] sm:$0xf]
    %v943 = vld [vmem:[%s8 + $0x10] sm:$0xf]
    %v944 = vld [vmem:[%s8 + $0x14] sm:$0xf]
    %v945 = vld [vmem:[%s8 + $0x18] sm:$0xf]
    %v946 = vld [vmem:[%s8 + $0x1c] sm:$0xf]
    %v947 = vld [vmem:[%s8 + $0x20] sm:$0xf]
    %v948 = vld [vmem:[%s8 + $0x24] sm:$0xf]
    %v949 = vld [vmem:[%s8 + $0x28] sm:$0xf]
    %v950 = vld [vmem:[%s8 + $0x2c] sm:$0xf]
    %v951 = vld [vmem:[%s8 + $0x30] sm:$0xf]
    %v952 = vld [vmem:[%s8 + $0x34] sm:$0xf]
    %v953 = vld [vmem:[%s8 + $0x38] sm:$0xf]
    %v954 = vld [vmem:[%s8 + $0x3c] sm:$0xf]
    %v955 = vld [vmem:[%s9] sm:$0x1]
    %v957 = vperm.slane %v955, 0
    %v975 = vunpack.c.l.b16 %v939
    %v976 = vunpack.c.l.b16 %v940
    %v977 = vunpack.c.l.b16 %v941
    %v978 = vunpack.c.l.b16 %v942
    %v979 = vunpack.c.l.b16 %v943
    %v980 = vunpack.c.l.b16 %v944
    %v981 = vunpack.c.l.b16 %v945
    %v982 = vunpack.c.l.b16 %v946
    %v983 = vunpack.c.l.b16 %v947
    %v984 = vunpack.c.l.b16 %v948
    %v985 = vunpack.c.l.b16 %v949
    %v986 = vunpack.c.l.b16 %v950
    %v987 = vunpack.c.l.b16 %v951
    %v988 = vunpack.c.l.b16 %v952
    %v989 = vunpack.c.l.b16 %v953
    %v990 = vunpack.c.l.b16 %v954
    %v991 = vpack.c.b16 %v976, %v975
    %v992 = vpack.c.b16 %v978, %v977
    %v993 = vpack.c.b16 %v980, %v979
    %v994 = vpack.c.b16 %v982, %v981
    %v995 = vpack.c.b16 %v984, %v983
    %v996 = vpack.c.b16 %v986, %v985
    %v997 = vpack.c.b16 %v988, %v987
    %v998 = vpack.c.b16 %v990, %v989
    %1007 = vmatpush.bf16.msra.mxu0 %v998
    %1008 = vmatpush.bf16.msra.mxu0 %v997
    %1009 = vmatpush.bf16.msra.mxu0 %v996
    %1010 = vmatpush.bf16.msra.mxu0 %v995
    %1011 = vmatpush.bf16.msra.mxu0 %v994
    %1012 = vmatpush.bf16.msra.mxu0 %v993
    %1013 = vmatpush.bf16.msra.mxu0 %v992
    %1014 = vmatpush.bf16.msra.mxu0 %v991
    %1015 = vmatmul.bf16.gmra.mxu0 %v938
    %v1016 = vpop.f32.mrf.mxu0
    %v1017 = vadd.f32 %v957, %v1016
    %v1018 = vpop.f32.mrf.mxu0
    %1019 = vdwg.mxu0
    %v1020 = vlaneseq
    %v1021 = vand.u32 %v1020, 127
    %v1022 = vld [vmem:[%s1] sm:$0xff]
    %v1023 = vmul.u32 %v1022, 8
    %1024 = vset.pattern.permute.xlu0 0
    %1025 = vperm.xlu0 %1024, %v1023
    %v1026 = vpop.permute.xlu0 %1025
    %vm1027 = vcmp.ge.s32.totalorder %v1021, %v1026
    %v1028 = vadd.s32 %v1023, 8
    %1029 = vset.pattern.permute.xlu0 0
    %1030 = vperm.xlu0 %1029, %v1028
    %v1031 = vpop.permute.xlu0 %1030
    %vm1032 = vcmp.lt.s32.totalorder %v1021, %v1031
    %vm1033 = vmand %vm1027, %vm1032
    %v1034 = vsel %vm1033, %v1017, 0.0
    %v1035 = vld [vmem:[%s10] sm:$0xff]
    %v1036 = vld [vmem:[%s10 + $0x8] sm:$0xff]
    %v1037 = vld [vmem:[%s10 + $0x10] sm:$0xff]
    %v1038 = vld [vmem:[%s10 + $0x18] sm:$0xff]
    %v1040 = vsel %vm120, %v1034, 0
    %1042 = vmatpush.msra.mxu0 0.0
    %1043 = vmatpush.msra.mxu0 0.0
    %1044 = vmatpush.msra.mxu0 0.0
    %1045 = vmatpush.msra.mxu0 0.0
    %1046 = vmatpush.msra.mxu0 0.0
    %1047 = vmatpush.msra.mxu0 0.0
    %1048 = vmatpush.msra.mxu0 0.0
    %1049 = vmatpush.msra.mxu0 0.0
    %1050 = vmatpush.msra.mxu0 0.0
    %1051 = vmatpush.msra.mxu0 0.0
    %1052 = vmatpush.msra.mxu0 0.0
    %1053 = vmatpush.msra.mxu0 0.0
    %1054 = vmatpush.msra.mxu0 %v1038
    %1055 = vmatpush.msra.mxu0 %v1037
    %1056 = vmatpush.msra.mxu0 %v1036
    %1057 = vmatpush.msra.mxu0 %v1035
    %1058 = vmatmul.f32.gmra.mxu0 %v1040
    %v1059 = vpop.f32.mrf.mxu0
    %v1060 = vadd.f32 0.0, %v1059
    %1061 = vdwg.mxu0
    %vm1062 = vcmask 64512
    %1063 = vst.msk [vmem:[%s11] sm:$0xff] %vm1062, %v1060
  $region53: #{recurrent_network_forward.1} parent=0 // pred_fallthru
    _
  // Predicated region
  $region54: #{recurrent_network_forward.1} parent=0 // pred_check
    _
  $region55: #{recurrent_network_forward.1} parent=0 // pred_check_branch
    %1065 = sbr.rel (0) target = $region57
  $region56: #{recurrent_network_forward.1} parent=0 // pred_region
    _
  $region57: #{recurrent_network_forward.1} parent=0 // pred_fallthru
    _
  // Predicated region
  $region58: #{recurrent_network_forward.1} parent=0 // pred_check
    _
  $region59: #{recurrent_network_forward.1} parent=0 // pred_check_branch
    %1067 = sbr.rel (0) target = $region61
  $region60: #{recurrent_network_forward.1} parent=0 // pred_region
    _
  $region61: #{recurrent_network_forward.1} parent=0 // pred_fallthru
    _

</llo_original>
